<compile_context>
chip_gen: v5e
topology: v5e:2x2
jax: 0.10.0
libtpu: 0.0.40
codegen_flags: <defaults>
</compile_context>

<pallas_src>
import jax
import jax.numpy as jnp
from jax import lax
from jax.experimental import pallas as pl
from jax.experimental.pallas import tpu as pltpu

K = 7      # conv kernel size
PAD = 3    # conv padding


def _largest_divisor_leq(n, cap):
    cap = max(1, min(n, cap))
    for d in range(cap, 0, -1):
        if n % d == 0:
            return d
    return 1


def _make_kernel(B_TILE, C_TILE, C_TOTAL, H, W, num_ct):
    WP = W + 2 * PAD             # per-image padded width (halo absorbs j shifts)
    AW = B_TILE * WP - 2 * PAD   # conv accumulator width over the packed images

    def kernel(x_ref, w_ref, o_ref, sum_ref, max_ref):
        # x_ref:   (B_TILE, C_TILE, H, W) VMEM
        # w_ref:   (2*K*K,)               SMEM (flat conv weights)
        # o_ref:   (B_TILE, 1, H, W)      VMEM (output attention maps)
        # sum/max: (B_TILE, H, W) f32     VMEM accumulators across channel tiles
        ct = pl.program_id(1)

        @pl.when(ct == 0)
        def _init():
            sum_ref[...] = jnp.zeros(sum_ref.shape, jnp.float32)
            max_ref[...] = jnp.full(max_ref.shape, -jnp.inf, jnp.float32)

        # Fused single-pass channel reduction: 1 load -> 1 add + 1 max.
        s = sum_ref[...]
        m = max_ref[...]
        for c in range(C_TILE):
            xc = x_ref[:, c].astype(jnp.float32)      # (B_TILE, H, W)
            s = s + xc
            m = jnp.maximum(m, xc)
        sum_ref[...] = s
        max_ref[...] = m

        @pl.when(ct == num_ct - 1)
        def _finalize():
            avg = s * jnp.float32(1.0 / C_TOTAL)      # (B_TILE, H, W)
            mx = m

            zc = jnp.zeros((H, PAD), jnp.float32)
            zr = jnp.zeros((PAD, B_TILE * WP), jnp.float32)

            def widen(a):  # (B_TILE, H, W) -> (H + 2*PAD, B_TILE * WP), in registers
                parts = []
                for b in range(B_TILE):
                    parts += [zc, a[b], zc]
                row = jnp.concatenate(parts, axis=1)          # (H, B_TILE*WP)
                return jnp.concatenate([zr, row, zr], axis=0)  # (H+6, B_TILE*WP)

            feats = (widen(avg), widen(mx))

            # 7x7 conv, stride 1, pad 3, no bias: 98-tap shift & accumulate on
            # the lane-packed maps.  Per-image 3-wide halos guarantee no bleed
            # between adjacent images for |shift| <= 3.
            acc = jnp.zeros((H, AW), jnp.float32)
            for cidx in range(2):
                wf = feats[cidx]
                for i in range(K):
                    for j in range(K):
                        wt = w_ref[cidx * K * K + i * K + j]   # SMEM scalar read
                        acc = acc + wt * lax.slice(wf, (i, j), (i + H, j + AW))

            attn = jax.nn.sigmoid(acc)                 # (H, AW)
            for b in range(B_TILE):
                o_ref[b, 0] = lax.slice(
                    attn, (0, b * WP), (H, b * WP + W)).astype(o_ref.dtype)

    return kernel


def spatial_attention(x, conv_weight):
    """x: (N, C, H, W) float32; conv_weight: (1, 2, 7, 7) float32."""
    N, C, H, W = x.shape
    w_flat = conv_weight.astype(jnp.float32).reshape(-1)   # (2*K*K,) = (98,)

    WP = W + 2 * PAD
    # Pack as many batch images as possible along the 128-lane dimension.
    B_TILE = _largest_divisor_leq(N, max(1, 128 // WP))

    # Channel tile sized so the double-buffered input block stays well under
    # the scoped-VMEM defaults of every generation (v5e 16 MiB, v6e/v7x 32 MiB).
    budget = 20 * 1024 * 1024
    fixed = 6 * B_TILE * H * W * 4            # accumulators + double-buffered out
    per_c = 2 * B_TILE * H * W * 4            # double-buffered input, per channel
    c_cap = max(1, min((budget - fixed) // per_c, 64))
    C_TILE = _largest_divisor_leq(C, c_cap)

    num_bt = N // B_TILE
    num_ct = C // C_TILE

    kernel = _make_kernel(B_TILE, C_TILE, C, H, W, num_ct)

    return pl.pallas_call(
        kernel,
        out_shape=jax.ShapeDtypeStruct((N, 1, H, W), jnp.float32),
        grid_spec=pltpu.PrefetchScalarGridSpec(
            num_scalar_prefetch=0,
            grid=(num_bt, num_ct),
            in_specs=[
                pl.BlockSpec((B_TILE, C_TILE, H, W), lambda bt, ct: (bt, ct, 0, 0)),
                pl.BlockSpec(memory_space=pltpu.MemorySpace.SMEM),
            ],
            out_specs=pl.BlockSpec((B_TILE, 1, H, W), lambda bt, ct: (bt, 0, 0, 0)),
            scratch_shapes=[
                pltpu.VMEM((B_TILE, H, W), jnp.float32),
                pltpu.VMEM((B_TILE, H, W), jnp.float32),
            ],
        ),
        compiler_params=pltpu.CompilerParams(
            dimension_semantics=("parallel", "arbitrary"),
            vmem_limit_bytes=32 * 1024 * 1024,
        ),
    )(x, w_flat)


def _reference(x, conv_weight):
    """Pure-JAX reference reproducing the PyTorch forward exactly."""
    avg_out = jnp.mean(x, axis=1, keepdims=True)
    max_out = jnp.max(x, axis=1, keepdims=True)
    feature = jnp.concatenate((avg_out, max_out), axis=1)   # (N, 2, H, W)
    conv = lax.conv_general_dilated(
        feature, conv_weight,
        window_strides=(1, 1),
        padding=((PAD, PAD), (PAD, PAD)),
        dimension_numbers=("NCHW", "OIHW", "NCHW"),
    )
    return jax.nn.sigmoid(conv)


if __name__ == "__main__":
    key = jax.random.PRNGKey(0)
    kx, kw = jax.random.split(key)

    N, C, H, W = 2, 4, 16, 16
    x = jax.random.normal(kx, (N, C, H, W), dtype=jnp.float32)
    # Deterministic synthetic conv weight: Conv2d(2, 1, kernel_size=7, bias=False)
    conv_weight = jax.random.normal(kw, (1, 2, K, K), dtype=jnp.float32) * 0.05

    out = spatial_attention(x, conv_weight)
    out = jax.block_until_ready(out)

    ref = _reference(x, conv_weight)
    assert out.shape == (N, 1, H, W)
    assert jnp.allclose(out, ref, atol=1e-5, rtol=1e-5), "mismatch vs reference"

    print("KERNEL_OK")
</pallas_src>

<mosaic_0001>
module attributes {stable_mosaic.version = 11 : i64} {
  func.func @kernel(%arg0: i32, %arg1: i32, %arg2: memref<2x4x16x16xf32, #tpu.memory_space<vmem>>, %arg3: memref<98xf32, #tpu.memory_space<smem>>, %arg4: memref<2x1x16x16xf32, #tpu.memory_space<vmem>>, %arg5: memref<2x16x16xf32, #tpu.memory_space<vmem>>, %arg6: memref<2x16x16xf32, #tpu.memory_space<vmem>>) attributes {dimension_semantics = [#tpu.dimension_semantics<parallel>, #tpu.dimension_semantics<arbitrary>], iteration_bounds = array<i64: 1, 1>, scalar_prefetch = 0 : i64, scratch_operands = 2 : i64, tpu.core_type = #tpu.core_type<tc>, window_params = [{transform_indices = @transform_0, window_bounds = array<i64: 2, 4, 16, 16>}, {transform_indices = @transform_1, window_bounds = array<i64: 98>}, {transform_indices = @transform_2, window_bounds = array<i64: 2, 1, 16, 16>}]} {
    %c0_i32 = arith.constant 0 : i32
    %0 = arith.cmpi eq, %arg1, %c0_i32 : i32
    %1 = arith.extui %0 : i1 to i32
    %c0_i32_0 = arith.constant 0 : i32
    %2 = arith.cmpi ne, %1, %c0_i32_0 : i32
    scf.if %2 {
      %cst = arith.constant 0.000000e+00 : f32
      %26 = vector.broadcast %cst : f32 to vector<2x16x16xf32>
      %c0_27 = arith.constant 0 : index
      %c0_28 = arith.constant 0 : index
      %c0_29 = arith.constant 0 : index
      %27 = vector.load %arg5[%c0_27, %c0_28, %c0_29] : memref<2x16x16xf32, #tpu.memory_space<vmem>>, vector<2x16x16xf32>
      tpu.vector_store %arg5[%c0_27, %c0_28, %c0_29], %26 {strides = array<i32>} : memref<2x16x16xf32, #tpu.memory_space<vmem>>, vector<2x16x16xf32>,
      %cst_30 = arith.constant 0xFF800000 : f32
      %28 = vector.broadcast %cst_30 : f32 to vector<2x16x16xf32>
      %c0_31 = arith.constant 0 : index
      %c0_32 = arith.constant 0 : index
      %c0_33 = arith.constant 0 : index
      %29 = vector.load %arg6[%c0_31, %c0_32, %c0_33] : memref<2x16x16xf32, #tpu.memory_space<vmem>>, vector<2x16x16xf32>
      tpu.vector_store %arg6[%c0_31, %c0_32, %c0_33], %28 {strides = array<i32>} : memref<2x16x16xf32, #tpu.memory_space<vmem>>, vector<2x16x16xf32>,
    } else {
    }
    %c0 = arith.constant 0 : index
    %c0_1 = arith.constant 0 : index
    %c0_2 = arith.constant 0 : index
    %3 = vector.load %arg5[%c0, %c0_1, %c0_2] : memref<2x16x16xf32, #tpu.memory_space<vmem>>, vector<2x16x16xf32>
    %c0_3 = arith.constant 0 : index
    %c0_4 = arith.constant 0 : index
    %c0_5 = arith.constant 0 : index
    %4 = vector.load %arg6[%c0_3, %c0_4, %c0_5] : memref<2x16x16xf32, #tpu.memory_space<vmem>>, vector<2x16x16xf32>
    %c0_6 = arith.constant 0 : index
    %c0_7 = arith.constant 0 : index
    %c0_8 = arith.constant 0 : index
    %c0_9 = arith.constant 0 : index
    %5 = vector.load %arg2[%c0_6, %c0_7, %c0_8, %c0_9] : memref<2x4x16x16xf32, #tpu.memory_space<vmem>>, vector<2x1x16x16xf32>
    %6 = vector.shape_cast %5 : vector<2x1x16x16xf32> to vector<2x16x16xf32>
    %7 = arith.addf %3, %6 : vector<2x16x16xf32>
    %8 = arith.maximumf %4, %6 : vector<2x16x16xf32>
    %c0_10 = arith.constant 0 : index
    %c1 = arith.constant 1 : index
    %c0_11 = arith.constant 0 : index
    %c0_12 = arith.constant 0 : index
    %9 = vector.load %arg2[%c0_10, %c1, %c0_11, %c0_12] : memref<2x4x16x16xf32, #tpu.memory_space<vmem>>, vector<2x1x16x16xf32>
    %10 = vector.shape_cast %9 : vector<2x1x16x16xf32> to vector<2x16x16xf32>
    %11 = arith.addf %7, %10 : vector<2x16x16xf32>
    %12 = arith.maximumf %8, %10 : vector<2x16x16xf32>
    %c0_13 = arith.constant 0 : index
    %c2 = arith.constant 2 : index
    %c0_14 = arith.constant 0 : index
    %c0_15 = arith.constant 0 : index
    %13 = vector.load %arg2[%c0_13, %c2, %c0_14, %c0_15] : memref<2x4x16x16xf32, #tpu.memory_space<vmem>>, vector<2x1x16x16xf32>
    %14 = vector.shape_cast %13 : vector<2x1x16x16xf32> to vector<2x16x16xf32>
    %15 = arith.addf %11, %14 : vector<2x16x16xf32>
    %16 = arith.maximumf %12, %14 : vector<2x16x16xf32>
    %c0_16 = arith.constant 0 : index
    %c3 = arith.constant 3 : index
    %c0_17 = arith.constant 0 : index
    %c0_18 = arith.constant 0 : index
    %17 = vector.load %arg2[%c0_16, %c3, %c0_17, %c0_18] : memref<2x4x16x16xf32, #tpu.memory_space<vmem>>, vector<2x1x16x16xf32>
    %18 = vector.shape_cast %17 : vector<2x1x16x16xf32> to vector<2x16x16xf32>
    %19 = arith.addf %15, %18 : vector<2x16x16xf32>
    %20 = arith.maximumf %16, %18 : vector<2x16x16xf32>
    %c0_19 = arith.constant 0 : index
    %c0_20 = arith.constant 0 : index
    %c0_21 = arith.constant 0 : index
    %21 = vector.load %arg5[%c0_19, %c0_20, %c0_21] : memref<2x16x16xf32, #tpu.memory_space<vmem>>, vector<2x16x16xf32>
    tpu.vector_store %arg5[%c0_19, %c0_20, %c0_21], %19 {strides = array<i32>} : memref<2x16x16xf32, #tpu.memory_space<vmem>>, vector<2x16x16xf32>,
    %c0_22 = arith.constant 0 : index
    %c0_23 = arith.constant 0 : index
    %c0_24 = arith.constant 0 : index
    %22 = vector.load %arg6[%c0_22, %c0_23, %c0_24] : memref<2x16x16xf32, #tpu.memory_space<vmem>>, vector<2x16x16xf32>
    tpu.vector_store %arg6[%c0_22, %c0_23, %c0_24], %20 {strides = array<i32>} : memref<2x16x16xf32, #tpu.memory_space<vmem>>, vector<2x16x16xf32>,
    %c0_i32_25 = arith.constant 0 : i32
    %23 = arith.cmpi eq, %arg1, %c0_i32_25 : i32
    %24 = arith.extui %23 : i1 to i32
    %c0_i32_26 = arith.constant 0 : i32
    %25 = arith.cmpi ne, %24, %c0_i32_26 : i32
    scf.if %25 {
      %cst = arith.constant 2.500000e-01 : f32
      %26 = vector.broadcast %cst : f32 to vector<2x16x16xf32>
      %27 = arith.mulf %19, %26 : vector<2x16x16xf32>
      %cst_27 = arith.constant 0.000000e+00 : f32
      %28 = vector.broadcast %cst_27 : f32 to vector<16x3xf32>
      %cst_28 = arith.constant 0.000000e+00 : f32
      %29 = vector.broadcast %cst_28 : f32 to vector<3x44xf32>
      %30 = vector.extract_strided_slice %27 {offsets = [0, 0, 0], sizes = [1, 16, 16], strides = [1, 1, 1]} : vector<2x16x16xf32> to vector<1x16x16xf32>
      %31 = vector.shape_cast %30 : vector<1x16x16xf32> to vector<16x16xf32>
      %32 = vector.extract_strided_slice %27 {offsets = [1, 0, 0], sizes = [1, 16, 16], strides = [1, 1, 1]} : vector<2x16x16xf32> to vector<1x16x16xf32>
      %33 = vector.shape_cast %32 : vector<1x16x16xf32> to vector<16x16xf32>
      %34 = tpu.concatenate %28, %31, %28, %28, %33, %28 in 1 : vector<16x3xf32>, vector<16x16xf32>, vector<16x3xf32>, vector<16x3xf32>, vector<16x16xf32>, vector<16x3xf32> -> vector<16x44xf32>
      %35 = tpu.concatenate %29, %34, %29 in 0 : vector<3x44xf32>, vector<16x44xf32>, vector<3x44xf32> -> vector<22x44xf32>
      %36 = vector.extract_strided_slice %20 {offsets = [0, 0, 0], sizes = [1, 16, 16], strides = [1, 1, 1]} : vector<2x16x16xf32> to vector<1x16x16xf32>
      %37 = vector.shape_cast %36 : vector<1x16x16xf32> to vector<16x16xf32>
      %38 = vector.extract_strided_slice %20 {offsets = [1, 0, 0], sizes = [1, 16, 16], strides = [1, 1, 1]} : vector<2x16x16xf32> to vector<1x16x16xf32>
      %39 = vector.shape_cast %38 : vector<1x16x16xf32> to vector<16x16xf32>
      %40 = tpu.concatenate %28, %37, %28, %28, %39, %28 in 1 : vector<16x3xf32>, vector<16x16xf32>, vector<16x3xf32>, vector<16x3xf32>, vector<16x16xf32>, vector<16x3xf32> -> vector<16x44xf32>
      %41 = tpu.concatenate %29, %40, %29 in 0 : vector<3x44xf32>, vector<16x44xf32>, vector<3x44xf32> -> vector<22x44xf32>
      %cst_29 = arith.constant 0.000000e+00 : f32
      %42 = vector.broadcast %cst_29 : f32 to vector<16x38xf32>
      %c0_30 = arith.constant 0 : index
      %43 = memref.load %arg3[%c0_30] : memref<98xf32, #tpu.memory_space<smem>>
      %44 = vector.extract_strided_slice %35 {offsets = [0, 0], sizes = [16, 38], strides = [1, 1]} : vector<22x44xf32> to vector<16x38xf32>
      %45 = vector.broadcast %43 : f32 to vector<16x38xf32>
      %46 = arith.mulf %45, %44 : vector<16x38xf32>
      %47 = arith.addf %42, %46 : vector<16x38xf32>
      %c1_31 = arith.constant 1 : index
      %48 = memref.load %arg3[%c1_31] : memref<98xf32, #tpu.memory_space<smem>>
      %49 = vector.extract_strided_slice %35 {offsets = [0, 1], sizes = [16, 38], strides = [1, 1]} : vector<22x44xf32> to vector<16x38xf32>
      %50 = vector.broadcast %48 : f32 to vector<16x38xf32>
      %51 = arith.mulf %50, %49 : vector<16x38xf32>
      %52 = arith.addf %47, %51 : vector<16x38xf32>
      %c2_32 = arith.constant 2 : index
      %53 = memref.load %arg3[%c2_32] : memref<98xf32, #tpu.memory_space<smem>>
      %54 = vector.extract_strided_slice %35 {offsets = [0, 2], sizes = [16, 38], strides = [1, 1]} : vector<22x44xf32> to vector<16x38xf32>
      %55 = vector.broadcast %53 : f32 to vector<16x38xf32>
      %56 = arith.mulf %55, %54 : vector<16x38xf32>
      %57 = arith.addf %52, %56 : vector<16x38xf32>
      %c3_33 = arith.constant 3 : index
      %58 = memref.load %arg3[%c3_33] : memref<98xf32, #tpu.memory_space<smem>>
      %59 = vector.extract_strided_slice %35 {offsets = [0, 3], sizes = [16, 38], strides = [1, 1]} : vector<22x44xf32> to vector<16x38xf32>
      %60 = vector.broadcast %58 : f32 to vector<16x38xf32>
      %61 = arith.mulf %60, %59 : vector<16x38xf32>
      %62 = arith.addf %57, %61 : vector<16x38xf32>
      %c4 = arith.constant 4 : index
      %63 = memref.load %arg3[%c4] : memref<98xf32, #tpu.memory_space<smem>>
      %64 = vector.extract_strided_slice %35 {offsets = [0, 4], sizes = [16, 38], strides = [1, 1]} : vector<22x44xf32> to vector<16x38xf32>
      %65 = vector.broadcast %63 : f32 to vector<16x38xf32>
      %66 = arith.mulf %65, %64 : vector<16x38xf32>
      %67 = arith.addf %62, %66 : vector<16x38xf32>
      %c5 = arith.constant 5 : index
      %68 = memref.load %arg3[%c5] : memref<98xf32, #tpu.memory_space<smem>>
      %69 = vector.extract_strided_slice %35 {offsets = [0, 5], sizes = [16, 38], strides = [1, 1]} : vector<22x44xf32> to vector<16x38xf32>
      %70 = vector.broadcast %68 : f32 to vector<16x38xf32>
      %71 = arith.mulf %70, %69 : vector<16x38xf32>
      %72 = arith.addf %67, %71 : vector<16x38xf32>
      %c6 = arith.constant 6 : index
      %73 = memref.load %arg3[%c6] : memref<98xf32, #tpu.memory_space<smem>>
      %74 = vector.extract_strided_slice %35 {offsets = [0, 6], sizes = [16, 38], strides = [1, 1]} : vector<22x44xf32> to vector<16x38xf32>
      %75 = vector.broadcast %73 : f32 to vector<16x38xf32>
      %76 = arith.mulf %75, %74 : vector<16x38xf32>
      %77 = arith.addf %72, %76 : vector<16x38xf32>
      %c7 = arith.constant 7 : index
      %78 = memref.load %arg3[%c7] : memref<98xf32, #tpu.memory_space<smem>>
      %79 = vector.extract_strided_slice %35 {offsets = [1, 0], sizes = [16, 38], strides = [1, 1]} : vector<22x44xf32> to vector<16x38xf32>
      %80 = vector.broadcast %78 : f32 to vector<16x38xf32>
      %81 = arith.mulf %80, %79 : vector<16x38xf32>
      %82 = arith.addf %77, %81 : vector<16x38xf32>
      %c8 = arith.constant 8 : index
      %83 = memref.load %arg3[%c8] : memref<98xf32, #tpu.memory_space<smem>>
      %84 = vector.extract_strided_slice %35 {offsets = [1, 1], sizes = [16, 38], strides = [1, 1]} : vector<22x44xf32> to vector<16x38xf32>
      %85 = vector.broadcast %83 : f32 to vector<16x38xf32>
      %86 = arith.mulf %85, %84 : vector<16x38xf32>
      %87 = arith.addf %82, %86 : vector<16x38xf32>
      %c9 = arith.constant 9 : index
      %88 = memref.load %arg3[%c9] : memref<98xf32, #tpu.memory_space<smem>>
      %89 = vector.extract_strided_slice %35 {offsets = [1, 2], sizes = [16, 38], strides = [1, 1]} : vector<22x44xf32> to vector<16x38xf32>
      %90 = vector.broadcast %88 : f32 to vector<16x38xf32>
      %91 = arith.mulf %90, %89 : vector<16x38xf32>
      %92 = arith.addf %87, %91 : vector<16x38xf32>
      %c10 = arith.constant 10 : index
      %93 = memref.load %arg3[%c10] : memref<98xf32, #tpu.memory_space<smem>>
      %94 = vector.extract_strided_slice %35 {offsets = [1, 3], sizes = [16, 38], strides = [1, 1]} : vector<22x44xf32> to vector<16x38xf32>
      %95 = vector.broadcast %93 : f32 to vector<16x38xf32>
      %96 = arith.mulf %95, %94 : vector<16x38xf32>
      %97 = arith.addf %92, %96 : vector<16x38xf32>
      %c11 = arith.constant 11 : index
      %98 = memref.load %arg3[%c11] : memref<98xf32, #tpu.memory_space<smem>>
      %99 = vector.extract_strided_slice %35 {offsets = [1, 4], sizes = [16, 38], strides = [1, 1]} : vector<22x44xf32> to vector<16x38xf32>
      %100 = vector.broadcast %98 : f32 to vector<16x38xf32>
      %101 = arith.mulf %100, %99 : vector<16x38xf32>
      %102 = arith.addf %97, %101 : vector<16x38xf32>
      %c12 = arith.constant 12 : index
      %103 = memref.load %arg3[%c12] : memref<98xf32, #tpu.memory_space<smem>>
      %104 = vector.extract_strided_slice %35 {offsets = [1, 5], sizes = [16, 38], strides = [1, 1]} : vector<22x44xf32> to vector<16x38xf32>
      %105 = vector.broadcast %103 : f32 to vector<16x38xf32>
      %106 = arith.mulf %105, %104 : vector<16x38xf32>
      %107 = arith.addf %102, %106 : vector<16x38xf32>
      %c13 = arith.constant 13 : index
      %108 = memref.load %arg3[%c13] : memref<98xf32, #tpu.memory_space<smem>>
      %109 = vector.extract_strided_slice %35 {offsets = [1, 6], sizes = [16, 38], strides = [1, 1]} : vector<22x44xf32> to vector<16x38xf32>
      %110 = vector.broadcast %108 : f32 to vector<16x38xf32>
      %111 = arith.mulf %110, %109 : vector<16x38xf32>
      %112 = arith.addf %107, %111 : vector<16x38xf32>
      %c14 = arith.constant 14 : index
      %113 = memref.load %arg3[%c14] : memref<98xf32, #tpu.memory_space<smem>>
      %114 = vector.extract_strided_slice %35 {offsets = [2, 0], sizes = [16, 38], strides = [1, 1]} : vector<22x44xf32> to vector<16x38xf32>
      %115 = vector.broadcast %113 : f32 to vector<16x38xf32>
      %116 = arith.mulf %115, %114 : vector<16x38xf32>
      %117 = arith.addf %112, %116 : vector<16x38xf32>
      %c15 = arith.constant 15 : index
      %118 = memref.load %arg3[%c15] : memref<98xf32, #tpu.memory_space<smem>>
      %119 = vector.extract_strided_slice %35 {offsets = [2, 1], sizes = [16, 38], strides = [1, 1]} : vector<22x44xf32> to vector<16x38xf32>
      %120 = vector.broadcast %118 : f32 to vector<16x38xf32>
      %121 = arith.mulf %120, %119 : vector<16x38xf32>
      %122 = arith.addf %117, %121 : vector<16x38xf32>
      %c16 = arith.constant 16 : index
      %123 = memref.load %arg3[%c16] : memref<98xf32, #tpu.memory_space<smem>>
      %124 = vector.extract_strided_slice %35 {offsets = [2, 2], sizes = [16, 38], strides = [1, 1]} : vector<22x44xf32> to vector<16x38xf32>
      %125 = vector.broadcast %123 : f32 to vector<16x38xf32>
      %126 = arith.mulf %125, %124 : vector<16x38xf32>
      %127 = arith.addf %122, %126 : vector<16x38xf32>
      %c17 = arith.constant 17 : index
      %128 = memref.load %arg3[%c17] : memref<98xf32, #tpu.memory_space<smem>>
      %129 = vector.extract_strided_slice %35 {offsets = [2, 3], sizes = [16, 38], strides = [1, 1]} : vector<22x44xf32> to vector<16x38xf32>
      %130 = vector.broadcast %128 : f32 to vector<16x38xf32>
      %131 = arith.mulf %130, %129 : vector<16x38xf32>
      %132 = arith.addf %127, %131 : vector<16x38xf32>
      %c18 = arith.constant 18 : index
      %133 = memref.load %arg3[%c18] : memref<98xf32, #tpu.memory_space<smem>>
      %134 = vector.extract_strided_slice %35 {offsets = [2, 4], sizes = [16, 38], strides = [1, 1]} : vector<22x44xf32> to vector<16x38xf32>
      %135 = vector.broadcast %133 : f32 to vector<16x38xf32>
      %136 = arith.mulf %135, %134 : vector<16x38xf32>
      %137 = arith.addf %132, %136 : vector<16x38xf32>
      %c19 = arith.constant 19 : index
      %138 = memref.load %arg3[%c19] : memref<98xf32, #tpu.memory_space<smem>>
      %139 = vector.extract_strided_slice %35 {offsets = [2, 5], sizes = [16, 38], strides = [1, 1]} : vector<22x44xf32> to vector<16x38xf32>
      %140 = vector.broadcast %138 : f32 to vector<16x38xf32>
      %141 = arith.mulf %140, %139 : vector<16x38xf32>
      %142 = arith.addf %137, %141 : vector<16x38xf32>
      %c20 = arith.constant 20 : index
      %143 = memref.load %arg3[%c20] : memref<98xf32, #tpu.memory_space<smem>>
      %144 = vector.extract_strided_slice %35 {offsets = [2, 6], sizes = [16, 38], strides = [1, 1]} : vector<22x44xf32> to vector<16x38xf32>
      %145 = vector.broadcast %143 : f32 to vector<16x38xf32>
      %146 = arith.mulf %145, %144 : vector<16x38xf32>
      %147 = arith.addf %142, %146 : vector<16x38xf32>
      %c21 = arith.constant 21 : index
      %148 = memref.load %arg3[%c21] : memref<98xf32, #tpu.memory_space<smem>>
      %149 = vector.extract_strided_slice %35 {offsets = [3, 0], sizes = [16, 38], strides = [1, 1]} : vector<22x44xf32> to vector<16x38xf32>
      %150 = vector.broadcast %148 : f32 to vector<16x38xf32>
      %151 = arith.mulf %150, %149 : vector<16x38xf32>
      %152 = arith.addf %147, %151 : vector<16x38xf32>
      %c22 = arith.constant 22 : index
      %153 = memref.load %arg3[%c22] : memref<98xf32, #tpu.memory_space<smem>>
      %154 = vector.extract_strided_slice %35 {offsets = [3, 1], sizes = [16, 38], strides = [1, 1]} : vector<22x44xf32> to vector<16x38xf32>
      %155 = vector.broadcast %153 : f32 to vector<16x38xf32>
      %156 = arith.mulf %155, %154 : vector<16x38xf32>
      %157 = arith.addf %152, %156 : vector<16x38xf32>
      %c23 = arith.constant 23 : index
      %158 = memref.load %arg3[%c23] : memref<98xf32, #tpu.memory_space<smem>>
      %159 = vector.extract_strided_slice %35 {offsets = [3, 2], sizes = [16, 38], strides = [1, 1]} : vector<22x44xf32> to vector<16x38xf32>
      %160 = vector.broadcast %158 : f32 to vector<16x38xf32>
      %161 = arith.mulf %160, %159 : vector<16x38xf32>
      %162 = arith.addf %157, %161 : vector<16x38xf32>
      %c24 = arith.constant 24 : index
      %163 = memref.load %arg3[%c24] : memref<98xf32, #tpu.memory_space<smem>>
      %164 = vector.extract_strided_slice %35 {offsets = [3, 3], sizes = [16, 38], strides = [1, 1]} : vector<22x44xf32> to vector<16x38xf32>
      %165 = vector.broadcast %163 : f32 to vector<16x38xf32>
      %166 = arith.mulf %165, %164 : vector<16x38xf32>
      %167 = arith.addf %162, %166 : vector<16x38xf32>
      %c25 = arith.constant 25 : index
      %168 = memref.load %arg3[%c25] : memref<98xf32, #tpu.memory_space<smem>>
      %169 = vector.extract_strided_slice %35 {offsets = [3, 4], sizes = [16, 38], strides = [1, 1]} : vector<22x44xf32> to vector<16x38xf32>
      %170 = vector.broadcast %168 : f32 to vector<16x38xf32>
      %171 = arith.mulf %170, %169 : vector<16x38xf32>
      %172 = arith.addf %167, %171 : vector<16x38xf32>
      %c26 = arith.constant 26 : index
      %173 = memref.load %arg3[%c26] : memref<98xf32, #tpu.memory_space<smem>>
      %174 = vector.extract_strided_slice %35 {offsets = [3, 5], sizes = [16, 38], strides = [1, 1]} : vector<22x44xf32> to vector<16x38xf32>
      %175 = vector.broadcast %173 : f32 to vector<16x38xf32>
      %176 = arith.mulf %175, %174 : vector<16x38xf32>
      %177 = arith.addf %172, %176 : vector<16x38xf32>
      %c27 = arith.constant 27 : index
      %178 = memref.load %arg3[%c27] : memref<98xf32, #tpu.memory_space<smem>>
      %179 = vector.extract_strided_slice %35 {offsets = [3, 6], sizes = [16, 38], strides = [1, 1]} : vector<22x44xf32> to vector<16x38xf32>
      %180 = vector.broadcast %178 : f32 to vector<16x38xf32>
      %181 = arith.mulf %180, %179 : vector<16x38xf32>
      %182 = arith.addf %177, %181 : vector<16x38xf32>
      %c28 = arith.constant 28 : index
      %183 = memref.load %arg3[%c28] : memref<98xf32, #tpu.memory_space<smem>>
      %184 = vector.extract_strided_slice %35 {offsets = [4, 0], sizes = [16, 38], strides = [1, 1]} : vector<22x44xf32> to vector<16x38xf32>
      %185 = vector.broadcast %183 : f32 to vector<16x38xf32>
      %186 = arith.mulf %185, %184 : vector<16x38xf32>
      %187 = arith.addf %182, %186 : vector<16x38xf32>
      %c29 = arith.constant 29 : index
      %188 = memref.load %arg3[%c29] : memref<98xf32, #tpu.memory_space<smem>>
      %189 = vector.extract_strided_slice %35 {offsets = [4, 1], sizes = [16, 38], strides = [1, 1]} : vector<22x44xf32> to vector<16x38xf32>
      %190 = vector.broadcast %188 : f32 to vector<16x38xf32>
      %191 = arith.mulf %190, %189 : vector<16x38xf32>
      %192 = arith.addf %187, %191 : vector<16x38xf32>
      %c30 = arith.constant 30 : index
      %193 = memref.load %arg3[%c30] : memref<98xf32, #tpu.memory_space<smem>>
      %194 = vector.extract_strided_slice %35 {offsets = [4, 2], sizes = [16, 38], strides = [1, 1]} : vector<22x44xf32> to vector<16x38xf32>
      %195 = vector.broadcast %193 : f32 to vector<16x38xf32>
      %196 = arith.mulf %195, %194 : vector<16x38xf32>
      %197 = arith.addf %192, %196 : vector<16x38xf32>
      %c31 = arith.constant 31 : index
      %198 = memref.load %arg3[%c31] : memref<98xf32, #tpu.memory_space<smem>>
      %199 = vector.extract_strided_slice %35 {offsets = [4, 3], sizes = [16, 38], strides = [1, 1]} : vector<22x44xf32> to vector<16x38xf32>
      %200 = vector.broadcast %198 : f32 to vector<16x38xf32>
      %201 = arith.mulf %200, %199 : vector<16x38xf32>
      %202 = arith.addf %197, %201 : vector<16x38xf32>
      %c32 = arith.constant 32 : index
      %203 = memref.load %arg3[%c32] : memref<98xf32, #tpu.memory_space<smem>>
      %204 = vector.extract_strided_slice %35 {offsets = [4, 4], sizes = [16, 38], strides = [1, 1]} : vector<22x44xf32> to vector<16x38xf32>
      %205 = vector.broadcast %203 : f32 to vector<16x38xf32>
      %206 = arith.mulf %205, %204 : vector<16x38xf32>
      %207 = arith.addf %202, %206 : vector<16x38xf32>
      %c33 = arith.constant 33 : index
      %208 = memref.load %arg3[%c33] : memref<98xf32, #tpu.memory_space<smem>>
      %209 = vector.extract_strided_slice %35 {offsets = [4, 5], sizes = [16, 38], strides = [1, 1]} : vector<22x44xf32> to vector<16x38xf32>
      %210 = vector.broadcast %208 : f32 to vector<16x38xf32>
      %211 = arith.mulf %210, %209 : vector<16x38xf32>
      %212 = arith.addf %207, %211 : vector<16x38xf32>
      %c34 = arith.constant 34 : index
      %213 = memref.load %arg3[%c34] : memref<98xf32, #tpu.memory_space<smem>>
      %214 = vector.extract_strided_slice %35 {offsets = [4, 6], sizes = [16, 38], strides = [1, 1]} : vector<22x44xf32> to vector<16x38xf32>
      %215 = vector.broadcast %213 : f32 to vector<16x38xf32>
      %216 = arith.mulf %215, %214 : vector<16x38xf32>
      %217 = arith.addf %212, %216 : vector<16x38xf32>
      %c35 = arith.constant 35 : index
      %218 = memref.load %arg3[%c35] : memref<98xf32, #tpu.memory_space<smem>>
      %219 = vector.extract_strided_slice %35 {offsets = [5, 0], sizes = [16, 38], strides = [1, 1]} : vector<22x44xf32> to vector<16x38xf32>
      %220 = vector.broadcast %218 : f32 to vector<16x38xf32>
      %221 = arith.mulf %220, %219 : vector<16x38xf32>
      %222 = arith.addf %217, %221 : vector<16x38xf32>
      %c36 = arith.constant 36 : index
      %223 = memref.load %arg3[%c36] : memref<98xf32, #tpu.memory_space<smem>>
      %224 = vector.extract_strided_slice %35 {offsets = [5, 1], sizes = [16, 38], strides = [1, 1]} : vector<22x44xf32> to vector<16x38xf32>
      %225 = vector.broadcast %223 : f32 to vector<16x38xf32>
      %226 = arith.mulf %225, %224 : vector<16x38xf32>
      %227 = arith.addf %222, %226 : vector<16x38xf32>
      %c37 = arith.constant 37 : index
      %228 = memref.load %arg3[%c37] : memref<98xf32, #tpu.memory_space<smem>>
      %229 = vector.extract_strided_slice %35 {offsets = [5, 2], sizes = [16, 38], strides = [1, 1]} : vector<22x44xf32> to vector<16x38xf32>
      %230 = vector.broadcast %228 : f32 to vector<16x38xf32>
      %231 = arith.mulf %230, %229 : vector<16x38xf32>
      %232 = arith.addf %227, %231 : vector<16x38xf32>
      %c38 = arith.constant 38 : index
      %233 = memref.load %arg3[%c38] : memref<98xf32, #tpu.memory_space<smem>>
      %234 = vector.extract_strided_slice %35 {offsets = [5, 3], sizes = [16, 38], strides = [1, 1]} : vector<22x44xf32> to vector<16x38xf32>
      %235 = vector.broadcast %233 : f32 to vector<16x38xf32>
      %236 = arith.mulf %235, %234 : vector<16x38xf32>
      %237 = arith.addf %232, %236 : vector<16x38xf32>
      %c39 = arith.constant 39 : index
      %238 = memref.load %arg3[%c39] : memref<98xf32, #tpu.memory_space<smem>>
      %239 = vector.extract_strided_slice %35 {offsets = [5, 4], sizes = [16, 38], strides = [1, 1]} : vector<22x44xf32> to vector<16x38xf32>
      %240 = vector.broadcast %238 : f32 to vector<16x38xf32>
      %241 = arith.mulf %240, %239 : vector<16x38xf32>
      %242 = arith.addf %237, %241 : vector<16x38xf32>
      %c40 = arith.constant 40 : index
      %243 = memref.load %arg3[%c40] : memref<98xf32, #tpu.memory_space<smem>>
      %244 = vector.extract_strided_slice %35 {offsets = [5, 5], sizes = [16, 38], strides = [1, 1]} : vector<22x44xf32> to vector<16x38xf32>
      %245 = vector.broadcast %243 : f32 to vector<16x38xf32>
      %246 = arith.mulf %245, %244 : vector<16x38xf32>
      %247 = arith.addf %242, %246 : vector<16x38xf32>
      %c41 = arith.constant 41 : index
      %248 = memref.load %arg3[%c41] : memref<98xf32, #tpu.memory_space<smem>>
      %249 = vector.extract_strided_slice %35 {offsets = [5, 6], sizes = [16, 38], strides = [1, 1]} : vector<22x44xf32> to vector<16x38xf32>
      %250 = vector.broadcast %248 : f32 to vector<16x38xf32>
      %251 = arith.mulf %250, %249 : vector<16x38xf32>
      %252 = arith.addf %247, %251 : vector<16x38xf32>
      %c42 = arith.constant 42 : index
      %253 = memref.load %arg3[%c42] : memref<98xf32, #tpu.memory_space<smem>>
      %254 = vector.extract_strided_slice %35 {offsets = [6, 0], sizes = [16, 38], strides = [1, 1]} : vector<22x44xf32> to vector<16x38xf32>
      %255 = vector.broadcast %253 : f32 to vector<16x38xf32>
      %256 = arith.mulf %255, %254 : vector<16x38xf32>
      %257 = arith.addf %252, %256 : vector<16x38xf32>
      %c43 = arith.constant 43 : index
      %258 = memref.load %arg3[%c43] : memref<98xf32, #tpu.memory_space<smem>>
      %259 = vector.extract_strided_slice %35 {offsets = [6, 1], sizes = [16, 38], strides = [1, 1]} : vector<22x44xf32> to vector<16x38xf32>
      %260 = vector.broadcast %258 : f32 to vector<16x38xf32>
      %261 = arith.mulf %260, %259 : vector<16x38xf32>
      %262 = arith.addf %257, %261 : vector<16x38xf32>
      %c44 = arith.constant 44 : index
      %263 = memref.load %arg3[%c44] : memref<98xf32, #tpu.memory_space<smem>>
      %264 = vector.extract_strided_slice %35 {offsets = [6, 2], sizes = [16, 38], strides = [1, 1]} : vector<22x44xf32> to vector<16x38xf32>
      %265 = vector.broadcast %263 : f32 to vector<16x38xf32>
      %266 = arith.mulf %265, %264 : vector<16x38xf32>
      %267 = arith.addf %262, %266 : vector<16x38xf32>
      %c45 = arith.constant 45 : index
      %268 = memref.load %arg3[%c45] : memref<98xf32, #tpu.memory_space<smem>>
      %269 = vector.extract_strided_slice %35 {offsets = [6, 3], sizes = [16, 38], strides = [1, 1]} : vector<22x44xf32> to vector<16x38xf32>
      %270 = vector.broadcast %268 : f32 to vector<16x38xf32>
      %271 = arith.mulf %270, %269 : vector<16x38xf32>
      %272 = arith.addf %267, %271 : vector<16x38xf32>
      %c46 = arith.constant 46 : index
      %273 = memref.load %arg3[%c46] : memref<98xf32, #tpu.memory_space<smem>>
      %274 = vector.extract_strided_slice %35 {offsets = [6, 4], sizes = [16, 38], strides = [1, 1]} : vector<22x44xf32> to vector<16x38xf32>
      %275 = vector.broadcast %273 : f32 to vector<16x38xf32>
      %276 = arith.mulf %275, %274 : vector<16x38xf32>
      %277 = arith.addf %272, %276 : vector<16x38xf32>
      %c47 = arith.constant 47 : index
      %278 = memref.load %arg3[%c47] : memref<98xf32, #tpu.memory_space<smem>>
      %279 = vector.extract_strided_slice %35 {offsets = [6, 5], sizes = [16, 38], strides = [1, 1]} : vector<22x44xf32> to vector<16x38xf32>
      %280 = vector.broadcast %278 : f32 to vector<16x38xf32>
      %281 = arith.mulf %280, %279 : vector<16x38xf32>
      %282 = arith.addf %277, %281 : vector<16x38xf32>
      %c48 = arith.constant 48 : index
      %283 = memref.load %arg3[%c48] : memref<98xf32, #tpu.memory_space<smem>>
      %284 = vector.extract_strided_slice %35 {offsets = [6, 6], sizes = [16, 38], strides = [1, 1]} : vector<22x44xf32> to vector<16x38xf32>
      %285 = vector.broadcast %283 : f32 to vector<16x38xf32>
      %286 = arith.mulf %285, %284 : vector<16x38xf32>
      %287 = arith.addf %282, %286 : vector<16x38xf32>
      %c49 = arith.constant 49 : index
      %288 = memref.load %arg3[%c49] : memref<98xf32, #tpu.memory_space<smem>>
      %289 = vector.extract_strided_slice %41 {offsets = [0, 0], sizes = [16, 38], strides = [1, 1]} : vector<22x44xf32> to vector<16x38xf32>
      %290 = vector.broadcast %288 : f32 to vector<16x38xf32>
      %291 = arith.mulf %290, %289 : vector<16x38xf32>
      %292 = arith.addf %287, %291 : vector<16x38xf32>
      %c50 = arith.constant 50 : index
      %293 = memref.load %arg3[%c50] : memref<98xf32, #tpu.memory_space<smem>>
      %294 = vector.extract_strided_slice %41 {offsets = [0, 1], sizes = [16, 38], strides = [1, 1]} : vector<22x44xf32> to vector<16x38xf32>
      %295 = vector.broadcast %293 : f32 to vector<16x38xf32>
      %296 = arith.mulf %295, %294 : vector<16x38xf32>
      %297 = arith.addf %292, %296 : vector<16x38xf32>
      %c51 = arith.constant 51 : index
      %298 = memref.load %arg3[%c51] : memref<98xf32, #tpu.memory_space<smem>>
      %299 = vector.extract_strided_slice %41 {offsets = [0, 2], sizes = [16, 38], strides = [1, 1]} : vector<22x44xf32> to vector<16x38xf32>
      %300 = vector.broadcast %298 : f32 to vector<16x38xf32>
      %301 = arith.mulf %300, %299 : vector<16x38xf32>
      %302 = arith.addf %297, %301 : vector<16x38xf32>
      %c52 = arith.constant 52 : index
      %303 = memref.load %arg3[%c52] : memref<98xf32, #tpu.memory_space<smem>>
      %304 = vector.extract_strided_slice %41 {offsets = [0, 3], sizes = [16, 38], strides = [1, 1]} : vector<22x44xf32> to vector<16x38xf32>
      %305 = vector.broadcast %303 : f32 to vector<16x38xf32>
      %306 = arith.mulf %305, %304 : vector<16x38xf32>
      %307 = arith.addf %302, %306 : vector<16x38xf32>
      %c53 = arith.constant 53 : index
      %308 = memref.load %arg3[%c53] : memref<98xf32, #tpu.memory_space<smem>>
      %309 = vector.extract_strided_slice %41 {offsets = [0, 4], sizes = [16, 38], strides = [1, 1]} : vector<22x44xf32> to vector<16x38xf32>
      %310 = vector.broadcast %308 : f32 to vector<16x38xf32>
      %311 = arith.mulf %310, %309 : vector<16x38xf32>
      %312 = arith.addf %307, %311 : vector<16x38xf32>
      %c54 = arith.constant 54 : index
      %313 = memref.load %arg3[%c54] : memref<98xf32, #tpu.memory_space<smem>>
      %314 = vector.extract_strided_slice %41 {offsets = [0, 5], sizes = [16, 38], strides = [1, 1]} : vector<22x44xf32> to vector<16x38xf32>
      %315 = vector.broadcast %313 : f32 to vector<16x38xf32>
      %316 = arith.mulf %315, %314 : vector<16x38xf32>
      %317 = arith.addf %312, %316 : vector<16x38xf32>
      %c55 = arith.constant 55 : index
      %318 = memref.load %arg3[%c55] : memref<98xf32, #tpu.memory_space<smem>>
      %319 = vector.extract_strided_slice %41 {offsets = [0, 6], sizes = [16, 38], strides = [1, 1]} : vector<22x44xf32> to vector<16x38xf32>
      %320 = vector.broadcast %318 : f32 to vector<16x38xf32>
      %321 = arith.mulf %320, %319 : vector<16x38xf32>
      %322 = arith.addf %317, %321 : vector<16x38xf32>
      %c56 = arith.constant 56 : index
      %323 = memref.load %arg3[%c56] : memref<98xf32, #tpu.memory_space<smem>>
      %324 = vector.extract_strided_slice %41 {offsets = [1, 0], sizes = [16, 38], strides = [1, 1]} : vector<22x44xf32> to vector<16x38xf32>
      %325 = vector.broadcast %323 : f32 to vector<16x38xf32>
      %326 = arith.mulf %325, %324 : vector<16x38xf32>
      %327 = arith.addf %322, %326 : vector<16x38xf32>
      %c57 = arith.constant 57 : index
      %328 = memref.load %arg3[%c57] : memref<98xf32, #tpu.memory_space<smem>>
      %329 = vector.extract_strided_slice %41 {offsets = [1, 1], sizes = [16, 38], strides = [1, 1]} : vector<22x44xf32> to vector<16x38xf32>
      %330 = vector.broadcast %328 : f32 to vector<16x38xf32>
      %331 = arith.mulf %330, %329 : vector<16x38xf32>
      %332 = arith.addf %327, %331 : vector<16x38xf32>
      %c58 = arith.constant 58 : index
      %333 = memref.load %arg3[%c58] : memref<98xf32, #tpu.memory_space<smem>>
      %334 = vector.extract_strided_slice %41 {offsets = [1, 2], sizes = [16, 38], strides = [1, 1]} : vector<22x44xf32> to vector<16x38xf32>
      %335 = vector.broadcast %333 : f32 to vector<16x38xf32>
      %336 = arith.mulf %335, %334 : vector<16x38xf32>
      %337 = arith.addf %332, %336 : vector<16x38xf32>
      %c59 = arith.constant 59 : index
      %338 = memref.load %arg3[%c59] : memref<98xf32, #tpu.memory_space<smem>>
      %339 = vector.extract_strided_slice %41 {offsets = [1, 3], sizes = [16, 38], strides = [1, 1]} : vector<22x44xf32> to vector<16x38xf32>
      %340 = vector.broadcast %338 : f32 to vector<16x38xf32>
      %341 = arith.mulf %340, %339 : vector<16x38xf32>
      %342 = arith.addf %337, %341 : vector<16x38xf32>
      %c60 = arith.constant 60 : index
      %343 = memref.load %arg3[%c60] : memref<98xf32, #tpu.memory_space<smem>>
      %344 = vector.extract_strided_slice %41 {offsets = [1, 4], sizes = [16, 38], strides = [1, 1]} : vector<22x44xf32> to vector<16x38xf32>
      %345 = vector.broadcast %343 : f32 to vector<16x38xf32>
      %346 = arith.mulf %345, %344 : vector<16x38xf32>
      %347 = arith.addf %342, %346 : vector<16x38xf32>
      %c61 = arith.constant 61 : index
      %348 = memref.load %arg3[%c61] : memref<98xf32, #tpu.memory_space<smem>>
      %349 = vector.extract_strided_slice %41 {offsets = [1, 5], sizes = [16, 38], strides = [1, 1]} : vector<22x44xf32> to vector<16x38xf32>
      %350 = vector.broadcast %348 : f32 to vector<16x38xf32>
      %351 = arith.mulf %350, %349 : vector<16x38xf32>
      %352 = arith.addf %347, %351 : vector<16x38xf32>
      %c62 = arith.constant 62 : index
      %353 = memref.load %arg3[%c62] : memref<98xf32, #tpu.memory_space<smem>>
      %354 = vector.extract_strided_slice %41 {offsets = [1, 6], sizes = [16, 38], strides = [1, 1]} : vector<22x44xf32> to vector<16x38xf32>
      %355 = vector.broadcast %353 : f32 to vector<16x38xf32>
      %356 = arith.mulf %355, %354 : vector<16x38xf32>
      %357 = arith.addf %352, %356 : vector<16x38xf32>
      %c63 = arith.constant 63 : index
      %358 = memref.load %arg3[%c63] : memref<98xf32, #tpu.memory_space<smem>>
      %359 = vector.extract_strided_slice %41 {offsets = [2, 0], sizes = [16, 38], strides = [1, 1]} : vector<22x44xf32> to vector<16x38xf32>
      %360 = vector.broadcast %358 : f32 to vector<16x38xf32>
      %361 = arith.mulf %360, %359 : vector<16x38xf32>
      %362 = arith.addf %357, %361 : vector<16x38xf32>
      %c64 = arith.constant 64 : index
      %363 = memref.load %arg3[%c64] : memref<98xf32, #tpu.memory_space<smem>>
      %364 = vector.extract_strided_slice %41 {offsets = [2, 1], sizes = [16, 38], strides = [1, 1]} : vector<22x44xf32> to vector<16x38xf32>
      %365 = vector.broadcast %363 : f32 to vector<16x38xf32>
      %366 = arith.mulf %365, %364 : vector<16x38xf32>
      %367 = arith.addf %362, %366 : vector<16x38xf32>
      %c65 = arith.constant 65 : index
      %368 = memref.load %arg3[%c65] : memref<98xf32, #tpu.memory_space<smem>>
      %369 = vector.extract_strided_slice %41 {offsets = [2, 2], sizes = [16, 38], strides = [1, 1]} : vector<22x44xf32> to vector<16x38xf32>
      %370 = vector.broadcast %368 : f32 to vector<16x38xf32>
      %371 = arith.mulf %370, %369 : vector<16x38xf32>
      %372 = arith.addf %367, %371 : vector<16x38xf32>
      %c66 = arith.constant 66 : index
      %373 = memref.load %arg3[%c66] : memref<98xf32, #tpu.memory_space<smem>>
      %374 = vector.extract_strided_slice %41 {offsets = [2, 3], sizes = [16, 38], strides = [1, 1]} : vector<22x44xf32> to vector<16x38xf32>
      %375 = vector.broadcast %373 : f32 to vector<16x38xf32>
      %376 = arith.mulf %375, %374 : vector<16x38xf32>
      %377 = arith.addf %372, %376 : vector<16x38xf32>
      %c67 = arith.constant 67 : index
      %378 = memref.load %arg3[%c67] : memref<98xf32, #tpu.memory_space<smem>>
      %379 = vector.extract_strided_slice %41 {offsets = [2, 4], sizes = [16, 38], strides = [1, 1]} : vector<22x44xf32> to vector<16x38xf32>
      %380 = vector.broadcast %378 : f32 to vector<16x38xf32>
      %381 = arith.mulf %380, %379 : vector<16x38xf32>
      %382 = arith.addf %377, %381 : vector<16x38xf32>
      %c68 = arith.constant 68 : index
      %383 = memref.load %arg3[%c68] : memref<98xf32, #tpu.memory_space<smem>>
      %384 = vector.extract_strided_slice %41 {offsets = [2, 5], sizes = [16, 38], strides = [1, 1]} : vector<22x44xf32> to vector<16x38xf32>
      %385 = vector.broadcast %383 : f32 to vector<16x38xf32>
      %386 = arith.mulf %385, %384 : vector<16x38xf32>
      %387 = arith.addf %382, %386 : vector<16x38xf32>
      %c69 = arith.constant 69 : index
      %388 = memref.load %arg3[%c69] : memref<98xf32, #tpu.memory_space<smem>>
      %389 = vector.extract_strided_slice %41 {offsets = [2, 6], sizes = [16, 38], strides = [1, 1]} : vector<22x44xf32> to vector<16x38xf32>
      %390 = vector.broadcast %388 : f32 to vector<16x38xf32>
      %391 = arith.mulf %390, %389 : vector<16x38xf32>
      %392 = arith.addf %387, %391 : vector<16x38xf32>
      %c70 = arith.constant 70 : index
      %393 = memref.load %arg3[%c70] : memref<98xf32, #tpu.memory_space<smem>>
      %394 = vector.extract_strided_slice %41 {offsets = [3, 0], sizes = [16, 38], strides = [1, 1]} : vector<22x44xf32> to vector<16x38xf32>
      %395 = vector.broadcast %393 : f32 to vector<16x38xf32>
      %396 = arith.mulf %395, %394 : vector<16x38xf32>
      %397 = arith.addf %392, %396 : vector<16x38xf32>
      %c71 = arith.constant 71 : index
      %398 = memref.load %arg3[%c71] : memref<98xf32, #tpu.memory_space<smem>>
      %399 = vector.extract_strided_slice %41 {offsets = [3, 1], sizes = [16, 38], strides = [1, 1]} : vector<22x44xf32> to vector<16x38xf32>
      %400 = vector.broadcast %398 : f32 to vector<16x38xf32>
      %401 = arith.mulf %400, %399 : vector<16x38xf32>
      %402 = arith.addf %397, %401 : vector<16x38xf32>
      %c72 = arith.constant 72 : index
      %403 = memref.load %arg3[%c72] : memref<98xf32, #tpu.memory_space<smem>>
      %404 = vector.extract_strided_slice %41 {offsets = [3, 2], sizes = [16, 38], strides = [1, 1]} : vector<22x44xf32> to vector<16x38xf32>
      %405 = vector.broadcast %403 : f32 to vector<16x38xf32>
      %406 = arith.mulf %405, %404 : vector<16x38xf32>
      %407 = arith.addf %402, %406 : vector<16x38xf32>
      %c73 = arith.constant 73 : index
      %408 = memref.load %arg3[%c73] : memref<98xf32, #tpu.memory_space<smem>>
      %409 = vector.extract_strided_slice %41 {offsets = [3, 3], sizes = [16, 38], strides = [1, 1]} : vector<22x44xf32> to vector<16x38xf32>
      %410 = vector.broadcast %408 : f32 to vector<16x38xf32>
      %411 = arith.mulf %410, %409 : vector<16x38xf32>
      %412 = arith.addf %407, %411 : vector<16x38xf32>
      %c74 = arith.constant 74 : index
      %413 = memref.load %arg3[%c74] : memref<98xf32, #tpu.memory_space<smem>>
      %414 = vector.extract_strided_slice %41 {offsets = [3, 4], sizes = [16, 38], strides = [1, 1]} : vector<22x44xf32> to vector<16x38xf32>
      %415 = vector.broadcast %413 : f32 to vector<16x38xf32>
      %416 = arith.mulf %415, %414 : vector<16x38xf32>
      %417 = arith.addf %412, %416 : vector<16x38xf32>
      %c75 = arith.constant 75 : index
      %418 = memref.load %arg3[%c75] : memref<98xf32, #tpu.memory_space<smem>>
      %419 = vector.extract_strided_slice %41 {offsets = [3, 5], sizes = [16, 38], strides = [1, 1]} : vector<22x44xf32> to vector<16x38xf32>
      %420 = vector.broadcast %418 : f32 to vector<16x38xf32>
      %421 = arith.mulf %420, %419 : vector<16x38xf32>
      %422 = arith.addf %417, %421 : vector<16x38xf32>
      %c76 = arith.constant 76 : index
      %423 = memref.load %arg3[%c76] : memref<98xf32, #tpu.memory_space<smem>>
      %424 = vector.extract_strided_slice %41 {offsets = [3, 6], sizes = [16, 38], strides = [1, 1]} : vector<22x44xf32> to vector<16x38xf32>
      %425 = vector.broadcast %423 : f32 to vector<16x38xf32>
      %426 = arith.mulf %425, %424 : vector<16x38xf32>
      %427 = arith.addf %422, %426 : vector<16x38xf32>
      %c77 = arith.constant 77 : index
      %428 = memref.load %arg3[%c77] : memref<98xf32, #tpu.memory_space<smem>>
      %429 = vector.extract_strided_slice %41 {offsets = [4, 0], sizes = [16, 38], strides = [1, 1]} : vector<22x44xf32> to vector<16x38xf32>
      %430 = vector.broadcast %428 : f32 to vector<16x38xf32>
      %431 = arith.mulf %430, %429 : vector<16x38xf32>
      %432 = arith.addf %427, %431 : vector<16x38xf32>
      %c78 = arith.constant 78 : index
      %433 = memref.load %arg3[%c78] : memref<98xf32, #tpu.memory_space<smem>>
      %434 = vector.extract_strided_slice %41 {offsets = [4, 1], sizes = [16, 38], strides = [1, 1]} : vector<22x44xf32> to vector<16x38xf32>
      %435 = vector.broadcast %433 : f32 to vector<16x38xf32>
      %436 = arith.mulf %435, %434 : vector<16x38xf32>
      %437 = arith.addf %432, %436 : vector<16x38xf32>
      %c79 = arith.constant 79 : index
      %438 = memref.load %arg3[%c79] : memref<98xf32, #tpu.memory_space<smem>>
      %439 = vector.extract_strided_slice %41 {offsets = [4, 2], sizes = [16, 38], strides = [1, 1]} : vector<22x44xf32> to vector<16x38xf32>
      %440 = vector.broadcast %438 : f32 to vector<16x38xf32>
      %441 = arith.mulf %440, %439 : vector<16x38xf32>
      %442 = arith.addf %437, %441 : vector<16x38xf32>
      %c80 = arith.constant 80 : index
      %443 = memref.load %arg3[%c80] : memref<98xf32, #tpu.memory_space<smem>>
      %444 = vector.extract_strided_slice %41 {offsets = [4, 3], sizes = [16, 38], strides = [1, 1]} : vector<22x44xf32> to vector<16x38xf32>
      %445 = vector.broadcast %443 : f32 to vector<16x38xf32>
      %446 = arith.mulf %445, %444 : vector<16x38xf32>
      %447 = arith.addf %442, %446 : vector<16x38xf32>
      %c81 = arith.constant 81 : index
      %448 = memref.load %arg3[%c81] : memref<98xf32, #tpu.memory_space<smem>>
      %449 = vector.extract_strided_slice %41 {offsets = [4, 4], sizes = [16, 38], strides = [1, 1]} : vector<22x44xf32> to vector<16x38xf32>
      %450 = vector.broadcast %448 : f32 to vector<16x38xf32>
      %451 = arith.mulf %450, %449 : vector<16x38xf32>
      %452 = arith.addf %447, %451 : vector<16x38xf32>
      %c82 = arith.constant 82 : index
      %453 = memref.load %arg3[%c82] : memref<98xf32, #tpu.memory_space<smem>>
      %454 = vector.extract_strided_slice %41 {offsets = [4, 5], sizes = [16, 38], strides = [1, 1]} : vector<22x44xf32> to vector<16x38xf32>
      %455 = vector.broadcast %453 : f32 to vector<16x38xf32>
      %456 = arith.mulf %455, %454 : vector<16x38xf32>
      %457 = arith.addf %452, %456 : vector<16x38xf32>
      %c83 = arith.constant 83 : index
      %458 = memref.load %arg3[%c83] : memref<98xf32, #tpu.memory_space<smem>>
      %459 = vector.extract_strided_slice %41 {offsets = [4, 6], sizes = [16, 38], strides = [1, 1]} : vector<22x44xf32> to vector<16x38xf32>
      %460 = vector.broadcast %458 : f32 to vector<16x38xf32>
      %461 = arith.mulf %460, %459 : vector<16x38xf32>
      %462 = arith.addf %457, %461 : vector<16x38xf32>
      %c84 = arith.constant 84 : index
      %463 = memref.load %arg3[%c84] : memref<98xf32, #tpu.memory_space<smem>>
      %464 = vector.extract_strided_slice %41 {offsets = [5, 0], sizes = [16, 38], strides = [1, 1]} : vector<22x44xf32> to vector<16x38xf32>
      %465 = vector.broadcast %463 : f32 to vector<16x38xf32>
      %466 = arith.mulf %465, %464 : vector<16x38xf32>
      %467 = arith.addf %462, %466 : vector<16x38xf32>
      %c85 = arith.constant 85 : index
      %468 = memref.load %arg3[%c85] : memref<98xf32, #tpu.memory_space<smem>>
      %469 = vector.extract_strided_slice %41 {offsets = [5, 1], sizes = [16, 38], strides = [1, 1]} : vector<22x44xf32> to vector<16x38xf32>
      %470 = vector.broadcast %468 : f32 to vector<16x38xf32>
      %471 = arith.mulf %470, %469 : vector<16x38xf32>
      %472 = arith.addf %467, %471 : vector<16x38xf32>
      %c86 = arith.constant 86 : index
      %473 = memref.load %arg3[%c86] : memref<98xf32, #tpu.memory_space<smem>>
      %474 = vector.extract_strided_slice %41 {offsets = [5, 2], sizes = [16, 38], strides = [1, 1]} : vector<22x44xf32> to vector<16x38xf32>
      %475 = vector.broadcast %473 : f32 to vector<16x38xf32>
      %476 = arith.mulf %475, %474 : vector<16x38xf32>
      %477 = arith.addf %472, %476 : vector<16x38xf32>
      %c87 = arith.constant 87 : index
      %478 = memref.load %arg3[%c87] : memref<98xf32, #tpu.memory_space<smem>>
      %479 = vector.extract_strided_slice %41 {offsets = [5, 3], sizes = [16, 38], strides = [1, 1]} : vector<22x44xf32> to vector<16x38xf32>
      %480 = vector.broadcast %478 : f32 to vector<16x38xf32>
      %481 = arith.mulf %480, %479 : vector<16x38xf32>
      %482 = arith.addf %477, %481 : vector<16x38xf32>
      %c88 = arith.constant 88 : index
      %483 = memref.load %arg3[%c88] : memref<98xf32, #tpu.memory_space<smem>>
      %484 = vector.extract_strided_slice %41 {offsets = [5, 4], sizes = [16, 38], strides = [1, 1]} : vector<22x44xf32> to vector<16x38xf32>
      %485 = vector.broadcast %483 : f32 to vector<16x38xf32>
      %486 = arith.mulf %485, %484 : vector<16x38xf32>
      %487 = arith.addf %482, %486 : vector<16x38xf32>
      %c89 = arith.constant 89 : index
      %488 = memref.load %arg3[%c89] : memref<98xf32, #tpu.memory_space<smem>>
      %489 = vector.extract_strided_slice %41 {offsets = [5, 5], sizes = [16, 38], strides = [1, 1]} : vector<22x44xf32> to vector<16x38xf32>
      %490 = vector.broadcast %488 : f32 to vector<16x38xf32>
      %491 = arith.mulf %490, %489 : vector<16x38xf32>
      %492 = arith.addf %487, %491 : vector<16x38xf32>
      %c90 = arith.constant 90 : index
      %493 = memref.load %arg3[%c90] : memref<98xf32, #tpu.memory_space<smem>>
      %494 = vector.extract_strided_slice %41 {offsets = [5, 6], sizes = [16, 38], strides = [1, 1]} : vector<22x44xf32> to vector<16x38xf32>
      %495 = vector.broadcast %493 : f32 to vector<16x38xf32>
      %496 = arith.mulf %495, %494 : vector<16x38xf32>
      %497 = arith.addf %492, %496 : vector<16x38xf32>
      %c91 = arith.constant 91 : index
      %498 = memref.load %arg3[%c91] : memref<98xf32, #tpu.memory_space<smem>>
      %499 = vector.extract_strided_slice %41 {offsets = [6, 0], sizes = [16, 38], strides = [1, 1]} : vector<22x44xf32> to vector<16x38xf32>
      %500 = vector.broadcast %498 : f32 to vector<16x38xf32>
      %501 = arith.mulf %500, %499 : vector<16x38xf32>
      %502 = arith.addf %497, %501 : vector<16x38xf32>
      %c92 = arith.constant 92 : index
      %503 = memref.load %arg3[%c92] : memref<98xf32, #tpu.memory_space<smem>>
      %504 = vector.extract_strided_slice %41 {offsets = [6, 1], sizes = [16, 38], strides = [1, 1]} : vector<22x44xf32> to vector<16x38xf32>
      %505 = vector.broadcast %503 : f32 to vector<16x38xf32>
      %506 = arith.mulf %505, %504 : vector<16x38xf32>
      %507 = arith.addf %502, %506 : vector<16x38xf32>
      %c93 = arith.constant 93 : index
      %508 = memref.load %arg3[%c93] : memref<98xf32, #tpu.memory_space<smem>>
      %509 = vector.extract_strided_slice %41 {offsets = [6, 2], sizes = [16, 38], strides = [1, 1]} : vector<22x44xf32> to vector<16x38xf32>
      %510 = vector.broadcast %508 : f32 to vector<16x38xf32>
      %511 = arith.mulf %510, %509 : vector<16x38xf32>
      %512 = arith.addf %507, %511 : vector<16x38xf32>
      %c94 = arith.constant 94 : index
      %513 = memref.load %arg3[%c94] : memref<98xf32, #tpu.memory_space<smem>>
      %514 = vector.extract_strided_slice %41 {offsets = [6, 3], sizes = [16, 38], strides = [1, 1]} : vector<22x44xf32> to vector<16x38xf32>
      %515 = vector.broadcast %513 : f32 to vector<16x38xf32>
      %516 = arith.mulf %515, %514 : vector<16x38xf32>
      %517 = arith.addf %512, %516 : vector<16x38xf32>
      %c95 = arith.constant 95 : index
      %518 = memref.load %arg3[%c95] : memref<98xf32, #tpu.memory_space<smem>>
      %519 = vector.extract_strided_slice %41 {offsets = [6, 4], sizes = [16, 38], strides = [1, 1]} : vector<22x44xf32> to vector<16x38xf32>
      %520 = vector.broadcast %518 : f32 to vector<16x38xf32>
      %521 = arith.mulf %520, %519 : vector<16x38xf32>
      %522 = arith.addf %517, %521 : vector<16x38xf32>
      %c96 = arith.constant 96 : index
      %523 = memref.load %arg3[%c96] : memref<98xf32, #tpu.memory_space<smem>>
      %524 = vector.extract_strided_slice %41 {offsets = [6, 5], sizes = [16, 38], strides = [1, 1]} : vector<22x44xf32> to vector<16x38xf32>
      %525 = vector.broadcast %523 : f32 to vector<16x38xf32>
      %526 = arith.mulf %525, %524 : vector<16x38xf32>
      %527 = arith.addf %522, %526 : vector<16x38xf32>
      %c97 = arith.constant 97 : index
      %528 = memref.load %arg3[%c97] : memref<98xf32, #tpu.memory_space<smem>>
      %529 = vector.extract_strided_slice %41 {offsets = [6, 6], sizes = [16, 38], strides = [1, 1]} : vector<22x44xf32> to vector<16x38xf32>
      %530 = vector.broadcast %528 : f32 to vector<16x38xf32>
      %531 = arith.mulf %530, %529 : vector<16x38xf32>
      %532 = arith.addf %527, %531 : vector<16x38xf32>
      %533 = arith.negf %532 : vector<16x38xf32>
      %534 = math.exp %533 : vector<16x38xf32>
      %cst_34 = arith.constant 1.000000e+00 : f32
      %535 = vector.broadcast %cst_34 : f32 to vector<16x38xf32>
      %536 = arith.addf %535, %534 : vector<16x38xf32>
      %537 = arith.divf %535, %536 : vector<16x38xf32>
      %538 = vector.extract_strided_slice %537 {offsets = [0, 0], sizes = [16, 16], strides = [1, 1]} : vector<16x38xf32> to vector<16x16xf32>
      %c0_35 = arith.constant 0 : index
      %c0_36 = arith.constant 0 : index
      %c0_37 = arith.constant 0 : index
      %c0_38 = arith.constant 0 : index
      %539 = vector.load %arg4[%c0_35, %c0_36, %c0_37, %c0_38] : memref<2x1x16x16xf32, #tpu.memory_space<vmem>>, vector<1x1x16x16xf32>
      %540 = vector.shape_cast %539 : vector<1x1x16x16xf32> to vector<16x16xf32>
      %541 = vector.shape_cast %538 : vector<16x16xf32> to vector<1x1x16x16xf32>
      tpu.vector_store %arg4[%c0_35, %c0_36, %c0_37, %c0_38], %541 {strides = array<i32>} : memref<2x1x16x16xf32, #tpu.memory_space<vmem>>, vector<1x1x16x16xf32>,
      %542 = vector.extract_strided_slice %537 {offsets = [0, 22], sizes = [16, 16], strides = [1, 1]} : vector<16x38xf32> to vector<16x16xf32>
      %c1_39 = arith.constant 1 : index
      %c0_40 = arith.constant 0 : index
      %c0_41 = arith.constant 0 : index
      %c0_42 = arith.constant 0 : index
      %543 = vector.load %arg4[%c1_39, %c0_40, %c0_41, %c0_42] : memref<2x1x16x16xf32, #tpu.memory_space<vmem>>, vector<1x1x16x16xf32>
      %544 = vector.shape_cast %543 : vector<1x1x16x16xf32> to vector<16x16xf32>
      %545 = vector.shape_cast %542 : vector<16x16xf32> to vector<1x1x16x16xf32>
      tpu.vector_store %arg4[%c1_39, %c0_40, %c0_41, %c0_42], %545 {strides = array<i32>} : memref<2x1x16x16xf32, #tpu.memory_space<vmem>>, vector<1x1x16x16xf32>,
    } else {
    }
    return
  }
  func.func @transform_0(%arg0: i32, %arg1: i32) -> (i32, i32, i32, i32) {
    %c0_i32 = arith.constant 0 : i32
    %c0_i32_0 = arith.constant 0 : i32
    %c0_i32_1 = arith.constant 0 : i32
    return %arg0, %arg1, %c0_i32, %c0_i32_0 : i32, i32, i32, i32
  }
  func.func @transform_1(%arg0: i32, %arg1: i32) -> i32 {
    %c0_i32 = arith.constant 0 : i32
    %c0_i32_0 = arith.constant 0 : i32
    return %c0_i32 : i32
  }
  func.func @transform_2(%arg0: i32, %arg1: i32) -> (i32, i32, i32, i32) {
    %c0_i32 = arith.constant 0 : i32
    %c0_i32_0 = arith.constant 0 : i32
    %c0_i32_1 = arith.constant 0 : i32
    %c0_i32_2 = arith.constant 0 : i32
    return %arg0, %c0_i32, %c0_i32_0, %c0_i32_1 : i32, i32, i32, i32
  }
}

</mosaic_0001>

<llo_original>
// kernel: tpu_custom_call.1
$region0: #{tpu_custom_call.1}
  #allocation0 [shape = 'u32[]', space=smem, size = 0x4, offset = 0x4, fixed_abs, tag = 'smem constant byte address 0x4 - core index']
  #allocation1 [shape = 'u32[72,128]{1,0:T(1,128)}', space=vmem, size = 0x9000, scoped, tag = 'internal scratch']
  #allocation2 [shape = 'f32[2,16,16]{2,1,0:T(8,128)}', space=vmem, size = 0x4000, scoped, tag = 'scratch operand']
  #allocation3 [shape = 'f32[2,16,16]{2,1,0:T(8,128)}', space=vmem, size = 0x4000, scoped, tag = 'scratch operand']
  %s0 = inlined_call_operand.hbm [shape: f32[2,4,16,16], index: 0, kind: input, shape index: {}]
  %s1 = inlined_call_operand.hbm [shape: f32[98], index: 1, kind: input, shape index: {}]
  %s2 = inlined_call_operand.hbm [shape: f32[2,1,16,16], index: 2, kind: output, shape index: {}]
  %s3 = sld [smem:[#allocation0]]
  $region34: #{tpu_custom_call.1} parent=0
    _
  %s5 = ssub.s32 1, %s3
  %s6 = scalar_select 0, %s5, %s3
  $region1: #{tpu_custom_call.1} parent=0
    #allocation4 [shape = 'u8[65536]{0}', space=vmem, size = 0x10000, scoped, tag = 'input window, operand 0, single buffered']
    #allocation5 [shape = 's32[1]{0}', space=sflag, size = 0x4, scoped, tag = 'scoped memory for tpu_custom_call.1']
    #allocation6 [shape = 's32[1]{0}', space=sflag, size = 0x4, scoped, tag = 'scoped memory for tpu_custom_call.1']
    #allocation7 [shape = 's32[1]{0}', space=sflag, size = 0x4, scoped, tag = 'scoped memory for tpu_custom_call.1']
    #allocation8 [shape = 'u8[512]{0}', space=smem, size = 0x200, scoped, tag = 'input window, operand 1, single buffered']
    #allocation9 [shape = 'u8[16384]{0}', space=vmem, size = 0x4000, scoped, tag = 'output window, operand 0, single buffered']
    %7 = vsyncpa [#allocation5], 0
    %8 = vsyncpa [#allocation7], 0
    %9 = vsyncpa [#allocation6], 0
    // Predicated region
    $region2: #{tpu_custom_call.1} parent=1 // pred_check
      _
    $region3: #{tpu_custom_call.1} parent=1 // pred_check_branch
      %11 = sbr.rel (0) target = $region5
    $region4: #{tpu_custom_call.1} parent=1 // pred_region
      %13 = vsyncadd [#allocation5], 0
      %s14 = sshll.u32 %s0, 4
      %s15 = int_to_ptr.hbm [resolvable:$true] %s14
      %s16 = sshll.u32 [#allocation4], 4
      %s17 = int_to_ptr.vmem [resolvable:$true] %s16
      %22 = dma.hbm_to_vmem [thread:$0]  %s15, 2048, %s17, [#allocation5], 128, 128, 8
    $region5: #{tpu_custom_call.1} parent=1 // pred_fallthru
      _
    // Predicated region
    $region6: #{tpu_custom_call.1} parent=1 // pred_check
      _
    $region7: #{tpu_custom_call.1} parent=1 // pred_check_branch
      %24 = sbr.rel (0) target = $region9
    $region8: #{tpu_custom_call.1} parent=1 // pred_region
      %26 = vsyncadd [#allocation7], 0
      %s28 = sshll.u32 %s1, 4
      %s29 = int_to_ptr.hbm [resolvable:$true] %s28
      %31 = dma.hbm_to_smem %s29, 16, [#allocation8], [#allocation7]
    $region9: #{tpu_custom_call.1} parent=1 // pred_fallthru
      _
    // Predicated region
    $region10: #{tpu_custom_call.1} parent=1 // pred_check
      _
    $region11: #{tpu_custom_call.1} parent=1 // pred_check_branch
      %33 = sbr.rel (0) target = $region13
    $region12: #{tpu_custom_call.1} parent=1 // pred_region
      %35 = dma.done [#allocation5], 2048
    $region13: #{tpu_custom_call.1} parent=1 // pred_fallthru
      _
    // Predicated region
    $region14: #{tpu_custom_call.1} parent=1 // pred_check
      _
    $region15: #{tpu_custom_call.1} parent=1 // pred_check_branch
      %37 = sbr.rel (0) target = $region17
    $region16: #{tpu_custom_call.1} parent=1 // pred_region
      %39 = dma.done [#allocation7], 16
    $region17: #{tpu_custom_call.1} parent=1 // pred_fallthru
      _
    %40 = sfence
    %p41 = scmp.eq.s32.totalorder 0, 0
    // Predicated region
    $region18: #{tpu_custom_call.1} parent=1 // pred_check
      %p42 = pneg %p41
    $region19: #{tpu_custom_call.1} parent=1 // pred_check_branch
      %44 = sbr.rel (%p42) target = $region21
    $region20: #{tpu_custom_call.1} parent=1 // pred_region
      %vm45 = vcmask 130048
      %46 = vst.msk [vmem:[#allocation2] sm:$0xff] %vm45, 0.0
      %47 = vst.msk [vmem:[#allocation2 + $0x8] sm:$0xff] %vm45, 0.0
      %48 = vst.msk [vmem:[#allocation2 + $0x10] sm:$0xff] %vm45, 0.0
      %49 = vst.msk [vmem:[#allocation2 + $0x18] sm:$0xff] %vm45, 0.0
      %50 = vst.msk [vmem:[#allocation3] sm:$0xff] %vm45, -inf
      %51 = vst.msk [vmem:[#allocation3 + $0x8] sm:$0xff] %vm45, -inf
      %52 = vst.msk [vmem:[#allocation3 + $0x10] sm:$0xff] %vm45, -inf
      %53 = vst.msk [vmem:[#allocation3 + $0x18] sm:$0xff] %vm45, -inf
    $region21: #{tpu_custom_call.1} parent=1 // pred_fallthru
      _
    %v54 = vld [vmem:[#allocation2] sm:$0xff]
    %v55 = vld [vmem:[#allocation2 + $0x8] sm:$0xff]
    %v56 = vld [vmem:[#allocation2 + $0x10] sm:$0xff]
    %v57 = vld [vmem:[#allocation2 + $0x18] sm:$0xff]
    %v58 = vld [vmem:[#allocation3] sm:$0xff]
    %v59 = vld [vmem:[#allocation3 + $0x8] sm:$0xff]
    %v60 = vld [vmem:[#allocation3 + $0x10] sm:$0xff]
    %v61 = vld [vmem:[#allocation3 + $0x18] sm:$0xff]
    %v62 = vld [vmem:[#allocation4] sm:$0xff]
    %v63 = vld [vmem:[#allocation4 + $0x8] sm:$0xff]
    %v64 = vld [vmem:[#allocation4 + $0x40] sm:$0xff]
    %v65 = vld [vmem:[#allocation4 + $0x48] sm:$0xff]
    %v66 = vadd.f32 %v54, %v62
    %v67 = vadd.f32 %v55, %v63
    %v68 = vadd.f32 %v56, %v64
    %v69 = vadd.f32 %v57, %v65
    %v70 = vmax.f32 %v58, %v62
    %v71 = vmax.f32 %v59, %v63
    %v72 = vmax.f32 %v60, %v64
    %v73 = vmax.f32 %v61, %v65
    %s74 = scalar_lea.vmem [#allocation4], 16
    %v75 = vld [vmem:[%s74] sm:$0xff]
    %v76 = vld [vmem:[%s74 + $0x8] sm:$0xff]
    %v77 = vld [vmem:[%s74 + $0x40] sm:$0xff]
    %v78 = vld [vmem:[%s74 + $0x48] sm:$0xff]
    %v79 = vadd.f32 %v66, %v75
    %v80 = vadd.f32 %v67, %v76
    %v81 = vadd.f32 %v68, %v77
    %v82 = vadd.f32 %v69, %v78
    %v83 = vmax.f32 %v70, %v75
    %v84 = vmax.f32 %v71, %v76
    %v85 = vmax.f32 %v72, %v77
    %v86 = vmax.f32 %v73, %v78
    %s87 = scalar_lea.vmem [#allocation4], 32
    %v88 = vld [vmem:[%s87] sm:$0xff]
    %v89 = vld [vmem:[%s87 + $0x8] sm:$0xff]
    %v90 = vld [vmem:[%s87 + $0x40] sm:$0xff]
    %v91 = vld [vmem:[%s87 + $0x48] sm:$0xff]
    %v92 = vadd.f32 %v79, %v88
    %v93 = vadd.f32 %v80, %v89
    %v94 = vadd.f32 %v81, %v90
    %v95 = vadd.f32 %v82, %v91
    %v96 = vmax.f32 %v83, %v88
    %v97 = vmax.f32 %v84, %v89
    %v98 = vmax.f32 %v85, %v90
    %v99 = vmax.f32 %v86, %v91
    %s100 = scalar_lea.vmem [#allocation4], 48
    %v101 = vld [vmem:[%s100] sm:$0xff]
    %v102 = vld [vmem:[%s100 + $0x8] sm:$0xff]
    %v103 = vld [vmem:[%s100 + $0x40] sm:$0xff]
    %v104 = vld [vmem:[%s100 + $0x48] sm:$0xff]
    %v105 = vadd.f32 %v92, %v101
    %v106 = vadd.f32 %v93, %v102
    %v107 = vadd.f32 %v94, %v103
    %v108 = vadd.f32 %v95, %v104
    %v109 = vmax.f32 %v96, %v101
    %v110 = vmax.f32 %v97, %v102
    %v111 = vmax.f32 %v98, %v103
    %v112 = vmax.f32 %v99, %v104
    %vm113 = vcmask 130048
    %114 = vst.msk [vmem:[#allocation2] sm:$0xff] %vm113, %v105
    %115 = vst.msk [vmem:[#allocation2 + $0x8] sm:$0xff] %vm113, %v106
    %116 = vst.msk [vmem:[#allocation2 + $0x10] sm:$0xff] %vm113, %v107
    %117 = vst.msk [vmem:[#allocation2 + $0x18] sm:$0xff] %vm113, %v108
    %118 = vst.msk [vmem:[#allocation3] sm:$0xff] %vm113, %v109
    %119 = vst.msk [vmem:[#allocation3 + $0x8] sm:$0xff] %vm113, %v110
    %120 = vst.msk [vmem:[#allocation3 + $0x10] sm:$0xff] %vm113, %v111
    %121 = vst.msk [vmem:[#allocation3 + $0x18] sm:$0xff] %vm113, %v112
    // Predicated region
    $region22: #{tpu_custom_call.1} parent=1 // pred_check
      %p122 = pneg %p41
    $region23: #{tpu_custom_call.1} parent=1 // pred_check_branch
      %124 = sbr.rel (%p122) target = $region25
    $region24: #{tpu_custom_call.1} parent=1 // pred_region
      %v125 = vmul.f32 %v105, 0.25
      %v126 = vmul.f32 %v106, 0.25
      %v127 = vmul.f32 %v107, 0.25
      %v128 = vmul.f32 %v108, 0.25
      %131 = vrot.lane.b32.xlu0 %v125, 3
      %v132 = vpop.permute.xlu0 %131
      %133 = vrot.lane.b32.xlu0 %v126, 3
      %v134 = vpop.permute.xlu0 %133
      %139 = vrot.lane.b32.xlu0 %v127, 25
      %v140 = vpop.permute.xlu0 %139
      %141 = vrot.lane.b32.xlu0 %v128, 25
      %v142 = vpop.permute.xlu0 %141
      %vm145 = vcmask 23552
      %v146 = vsel %vm145, 0.0, %v132
      %v147 = vsel %vm145, 0.0, %v134
      %vm148 = vcmask 154624
      %v149 = vsel %vm148, %v146, 0.0
      %v150 = vsel %vm148, %v147, 0.0
      %vm151 = vcmask 179200
      %v152 = vsel %vm151, %v149, 0.0
      %v153 = vsel %vm151, %v150, 0.0
      %vm154 = vcmask 203776
      %v155 = vsel %vm154, %v152, %v140
      %v156 = vsel %vm154, %v153, %v142
      %vm157 = vcmask 334848
      %v158 = vsel %vm157, %v155, 0.0
      %v159 = vsel %vm157, %v156, 0.0
      %vm162 = vcmask 1042432
      %v163 = vrot.slane %v158, 5
      %v164 = vrot.slane %v159, 5
      %v165 = vsel %vm162, %v163, %v164
      %v169 = vsel %vm162, 0.0, %v163
      %v170 = vsel %vm162, %v164, 0.0
      %173 = vrot.lane.b32.xlu0 %v109, 3
      %v174 = vpop.permute.xlu0 %173
      %175 = vrot.lane.b32.xlu0 %v110, 3
      %v176 = vpop.permute.xlu0 %175
      %181 = vrot.lane.b32.xlu0 %v111, 25
      %v182 = vpop.permute.xlu0 %181
      %183 = vrot.lane.b32.xlu0 %v112, 25
      %v184 = vpop.permute.xlu0 %183
      %v187 = vsel %vm145, 0.0, %v174
      %v188 = vsel %vm145, 0.0, %v176
      %v189 = vsel %vm148, %v187, 0.0
      %v190 = vsel %vm148, %v188, 0.0
      %v191 = vsel %vm151, %v189, 0.0
      %v192 = vsel %vm151, %v190, 0.0
      %v193 = vsel %vm154, %v191, %v182
      %v194 = vsel %vm154, %v192, %v184
      %v195 = vsel %vm157, %v193, 0.0
      %v196 = vsel %vm157, %v194, 0.0
      %v199 = vrot.slane %v195, 5
      %v200 = vrot.slane %v196, 5
      %v201 = vsel %vm162, %v199, %v200
      %v205 = vsel %vm162, 0.0, %v199
      %v206 = vsel %vm162, %v200, 0.0
      %s207 = sld [smem:[#allocation8]]
      %v208 = vstv %s207
      %v209 = vmul.f32 %v208, %v169
      %v210 = vmul.f32 %v208, %v165
      %v211 = vadd.f32 %v209, 0.0
      %v212 = vadd.f32 %v210, 0.0
      %s213 = sld [smem:[#allocation8 + $0x1]]
      %v214 = vstv %s213
      %v215 = vmul.f32 %v214, %v169
      %v216 = vmul.f32 %v214, %v165
      %219 = vrot.lane.b32.xlu0 %v215, 127
      %v220 = vpop.permute.xlu0 %219
      %221 = vrot.lane.b32.xlu0 %v216, 127
      %v222 = vpop.permute.xlu0 %221
      %v225 = vadd.f32 %v211, %v220
      %v226 = vadd.f32 %v212, %v222
      %s227 = sld [smem:[#allocation8 + $0x2]]
      %v228 = vstv %s227
      %v229 = vmul.f32 %v228, %v169
      %v230 = vmul.f32 %v228, %v165
      %233 = vrot.lane.b32.xlu0 %v229, 126
      %v234 = vpop.permute.xlu0 %233
      %235 = vrot.lane.b32.xlu0 %v230, 126
      %v236 = vpop.permute.xlu0 %235
      %v239 = vadd.f32 %v225, %v234
      %v240 = vadd.f32 %v226, %v236
      %s241 = sld [smem:[#allocation8 + $0x3]]
      %v242 = vstv %s241
      %v243 = vmul.f32 %v242, %v169
      %v244 = vmul.f32 %v242, %v165
      %247 = vrot.lane.b32.xlu0 %v243, 125
      %v248 = vpop.permute.xlu0 %247
      %249 = vrot.lane.b32.xlu0 %v244, 125
      %v250 = vpop.permute.xlu0 %249
      %v253 = vadd.f32 %v239, %v248
      %v254 = vadd.f32 %v240, %v250
      %s255 = sld [smem:[#allocation8 + $0x4]]
      %v256 = vstv %s255
      %v257 = vmul.f32 %v256, %v169
      %v258 = vmul.f32 %v256, %v165
      %261 = vrot.lane.b32.xlu0 %v257, 124
      %v262 = vpop.permute.xlu0 %261
      %263 = vrot.lane.b32.xlu0 %v258, 124
      %v264 = vpop.permute.xlu0 %263
      %v267 = vadd.f32 %v253, %v262
      %v268 = vadd.f32 %v254, %v264
      %s269 = sld [smem:[#allocation8 + $0x5]]
      %v270 = vstv %s269
      %v271 = vmul.f32 %v270, %v169
      %v272 = vmul.f32 %v270, %v165
      %275 = vrot.lane.b32.xlu0 %v271, 123
      %v276 = vpop.permute.xlu0 %275
      %277 = vrot.lane.b32.xlu0 %v272, 123
      %v278 = vpop.permute.xlu0 %277
      %v281 = vadd.f32 %v267, %v276
      %v282 = vadd.f32 %v268, %v278
      %s283 = sld [smem:[#allocation8 + $0x6]]
      %v284 = vstv %s283
      %v285 = vmul.f32 %v284, %v169
      %v286 = vmul.f32 %v284, %v165
      %289 = vrot.lane.b32.xlu0 %v285, 122
      %v290 = vpop.permute.xlu0 %289
      %291 = vrot.lane.b32.xlu0 %v286, 122
      %v292 = vpop.permute.xlu0 %291
      %v295 = vadd.f32 %v281, %v290
      %v296 = vadd.f32 %v282, %v292
      %s297 = sld [smem:[#allocation8 + $0x7]]
      %v298 = vstv %s297
      %v299 = vmul.f32 %v298, %v169
      %v300 = vmul.f32 %v298, %v165
      %v301 = vmul.f32 %v298, %v170
      %vm305 = vcmask 1046528
      %v306 = vrot.slane %v299, 1
      %v307 = vrot.slane %v300, 1
      %v308 = vsel %vm305, %v306, %v307
      %v309 = vrot.slane %v301, 1
      %v310 = vsel %vm305, %v307, %v309
      %v313 = vadd.f32 %v295, %v308
      %v314 = vadd.f32 %v296, %v310
      %s315 = sld [smem:[#allocation8 + $0x8]]
      %v316 = vstv %s315
      %v317 = vmul.f32 %v316, %v169
      %v318 = vmul.f32 %v316, %v165
      %v319 = vmul.f32 %v316, %v170
      %v323 = vrot.slane %v317, 1
      %v324 = vrot.slane %v318, 1
      %v325 = vsel %vm305, %v323, %v324
      %v326 = vrot.slane %v319, 1
      %v327 = vsel %vm305, %v324, %v326
      %328 = vrot.lane.b32.xlu0 %v325, 127
      %v329 = vpop.permute.xlu0 %328
      %330 = vrot.lane.b32.xlu0 %v327, 127
      %v331 = vpop.permute.xlu0 %330
      %v334 = vadd.f32 %v313, %v329
      %v335 = vadd.f32 %v314, %v331
      %s336 = sld [smem:[#allocation8 + $0x9]]
      %v337 = vstv %s336
      %v338 = vmul.f32 %v337, %v169
      %v339 = vmul.f32 %v337, %v165
      %v340 = vmul.f32 %v337, %v170
      %v344 = vrot.slane %v338, 1
      %v345 = vrot.slane %v339, 1
      %v346 = vsel %vm305, %v344, %v345
      %v347 = vrot.slane %v340, 1
      %v348 = vsel %vm305, %v345, %v347
      %349 = vrot.lane.b32.xlu0 %v346, 126
      %v350 = vpop.permute.xlu0 %349
      %351 = vrot.lane.b32.xlu0 %v348, 126
      %v352 = vpop.permute.xlu0 %351
      %v355 = vadd.f32 %v334, %v350
      %v356 = vadd.f32 %v335, %v352
      %s357 = sld [smem:[#allocation8 + $0xa]]
      %v358 = vstv %s357
      %v359 = vmul.f32 %v358, %v169
      %v360 = vmul.f32 %v358, %v165
      %v361 = vmul.f32 %v358, %v170
      %v365 = vrot.slane %v359, 1
      %v366 = vrot.slane %v360, 1
      %v367 = vsel %vm305, %v365, %v366
      %v368 = vrot.slane %v361, 1
      %v369 = vsel %vm305, %v366, %v368
      %370 = vrot.lane.b32.xlu0 %v367, 125
      %v371 = vpop.permute.xlu0 %370
      %372 = vrot.lane.b32.xlu0 %v369, 125
      %v373 = vpop.permute.xlu0 %372
      %v376 = vadd.f32 %v355, %v371
      %v377 = vadd.f32 %v356, %v373
      %s378 = sld [smem:[#allocation8 + $0xb]]
      %v379 = vstv %s378
      %v380 = vmul.f32 %v379, %v169
      %v381 = vmul.f32 %v379, %v165
      %v382 = vmul.f32 %v379, %v170
      %v386 = vrot.slane %v380, 1
      %v387 = vrot.slane %v381, 1
      %v388 = vsel %vm305, %v386, %v387
      %v389 = vrot.slane %v382, 1
      %v390 = vsel %vm305, %v387, %v389
      %391 = vrot.lane.b32.xlu0 %v388, 124
      %v392 = vpop.permute.xlu0 %391
      %393 = vrot.lane.b32.xlu0 %v390, 124
      %v394 = vpop.permute.xlu0 %393
      %v397 = vadd.f32 %v376, %v392
      %v398 = vadd.f32 %v377, %v394
      %s399 = sld [smem:[#allocation8 + $0xc]]
      %v400 = vstv %s399
      %v401 = vmul.f32 %v400, %v169
      %v402 = vmul.f32 %v400, %v165
      %v403 = vmul.f32 %v400, %v170
      %v407 = vrot.slane %v401, 1
      %v408 = vrot.slane %v402, 1
      %v409 = vsel %vm305, %v407, %v408
      %v410 = vrot.slane %v403, 1
      %v411 = vsel %vm305, %v408, %v410
      %412 = vrot.lane.b32.xlu0 %v409, 123
      %v413 = vpop.permute.xlu0 %412
      %414 = vrot.lane.b32.xlu0 %v411, 123
      %v415 = vpop.permute.xlu0 %414
      %v418 = vadd.f32 %v397, %v413
      %v419 = vadd.f32 %v398, %v415
      %s420 = sld [smem:[#allocation8 + $0xd]]
      %v421 = vstv %s420
      %v422 = vmul.f32 %v421, %v169
      %v423 = vmul.f32 %v421, %v165
      %v424 = vmul.f32 %v421, %v170
      %v428 = vrot.slane %v422, 1
      %v429 = vrot.slane %v423, 1
      %v430 = vsel %vm305, %v428, %v429
      %v431 = vrot.slane %v424, 1
      %v432 = vsel %vm305, %v429, %v431
      %433 = vrot.lane.b32.xlu0 %v430, 122
      %v434 = vpop.permute.xlu0 %433
      %435 = vrot.lane.b32.xlu0 %v432, 122
      %v436 = vpop.permute.xlu0 %435
      %v439 = vadd.f32 %v418, %v434
      %v440 = vadd.f32 %v419, %v436
      %s441 = sld [smem:[#allocation8 + $0xe]]
      %v442 = vstv %s441
      %v443 = vmul.f32 %v442, %v169
      %v444 = vmul.f32 %v442, %v165
      %v445 = vmul.f32 %v442, %v170
      %vm449 = vcmask 1045504
      %v450 = vrot.slane %v443, 2
      %v451 = vrot.slane %v444, 2
      %v452 = vsel %vm449, %v450, %v451
      %v453 = vrot.slane %v445, 2
      %v454 = vsel %vm449, %v451, %v453
      %v457 = vadd.f32 %v439, %v452
      %v458 = vadd.f32 %v440, %v454
      %s459 = sld [smem:[#allocation8 + $0xf]]
      %v460 = vstv %s459
      %v461 = vmul.f32 %v460, %v169
      %v462 = vmul.f32 %v460, %v165
      %v463 = vmul.f32 %v460, %v170
      %v467 = vrot.slane %v461, 2
      %v468 = vrot.slane %v462, 2
      %v469 = vsel %vm449, %v467, %v468
      %v470 = vrot.slane %v463, 2
      %v471 = vsel %vm449, %v468, %v470
      %472 = vrot.lane.b32.xlu0 %v469, 127
      %v473 = vpop.permute.xlu0 %472
      %474 = vrot.lane.b32.xlu0 %v471, 127
      %v475 = vpop.permute.xlu0 %474
      %v478 = vadd.f32 %v457, %v473
      %v479 = vadd.f32 %v458, %v475
      %s480 = sld [smem:[#allocation8 + $0x10]]
      %v481 = vstv %s480
      %v482 = vmul.f32 %v481, %v169
      %v483 = vmul.f32 %v481, %v165
      %v484 = vmul.f32 %v481, %v170
      %v488 = vrot.slane %v482, 2
      %v489 = vrot.slane %v483, 2
      %v490 = vsel %vm449, %v488, %v489
      %v491 = vrot.slane %v484, 2
      %v492 = vsel %vm449, %v489, %v491
      %493 = vrot.lane.b32.xlu0 %v490, 126
      %v494 = vpop.permute.xlu0 %493
      %495 = vrot.lane.b32.xlu0 %v492, 126
      %v496 = vpop.permute.xlu0 %495
      %v499 = vadd.f32 %v478, %v494
      %v500 = vadd.f32 %v479, %v496
      %s501 = sld [smem:[#allocation8 + $0x11]]
      %v502 = vstv %s501
      %v503 = vmul.f32 %v502, %v169
      %v504 = vmul.f32 %v502, %v165
      %v505 = vmul.f32 %v502, %v170
      %v509 = vrot.slane %v503, 2
      %v510 = vrot.slane %v504, 2
      %v511 = vsel %vm449, %v509, %v510
      %v512 = vrot.slane %v505, 2
      %v513 = vsel %vm449, %v510, %v512
      %514 = vrot.lane.b32.xlu0 %v511, 125
      %v515 = vpop.permute.xlu0 %514
      %516 = vrot.lane.b32.xlu0 %v513, 125
      %v517 = vpop.permute.xlu0 %516
      %v520 = vadd.f32 %v499, %v515
      %v521 = vadd.f32 %v500, %v517
      %s522 = sld [smem:[#allocation8 + $0x12]]
      %v523 = vstv %s522
      %v524 = vmul.f32 %v523, %v169
      %v525 = vmul.f32 %v523, %v165
      %v526 = vmul.f32 %v523, %v170
      %v530 = vrot.slane %v524, 2
      %v531 = vrot.slane %v525, 2
      %v532 = vsel %vm449, %v530, %v531
      %v533 = vrot.slane %v526, 2
      %v534 = vsel %vm449, %v531, %v533
      %535 = vrot.lane.b32.xlu0 %v532, 124
      %v536 = vpop.permute.xlu0 %535
      %537 = vrot.lane.b32.xlu0 %v534, 124
      %v538 = vpop.permute.xlu0 %537
      %v541 = vadd.f32 %v520, %v536
      %v542 = vadd.f32 %v521, %v538
      %s543 = sld [smem:[#allocation8 + $0x13]]
      %v544 = vstv %s543
      %v545 = vmul.f32 %v544, %v169
      %v546 = vmul.f32 %v544, %v165
      %v547 = vmul.f32 %v544, %v170
      %v551 = vrot.slane %v545, 2
      %v552 = vrot.slane %v546, 2
      %v553 = vsel %vm449, %v551, %v552
      %v554 = vrot.slane %v547, 2
      %v555 = vsel %vm449, %v552, %v554
      %556 = vrot.lane.b32.xlu0 %v553, 123
      %v557 = vpop.permute.xlu0 %556
      %558 = vrot.lane.b32.xlu0 %v555, 123
      %v559 = vpop.permute.xlu0 %558
      %v562 = vadd.f32 %v541, %v557
      %v563 = vadd.f32 %v542, %v559
      %s564 = sld [smem:[#allocation8 + $0x14]]
      %v565 = vstv %s564
      %v566 = vmul.f32 %v565, %v169
      %v567 = vmul.f32 %v565, %v165
      %v568 = vmul.f32 %v565, %v170
      %v572 = vrot.slane %v566, 2
      %v573 = vrot.slane %v567, 2
      %v574 = vsel %vm449, %v572, %v573
      %v575 = vrot.slane %v568, 2
      %v576 = vsel %vm449, %v573, %v575
      %577 = vrot.lane.b32.xlu0 %v574, 122
      %v578 = vpop.permute.xlu0 %577
      %579 = vrot.lane.b32.xlu0 %v576, 122
      %v580 = vpop.permute.xlu0 %579
      %v583 = vadd.f32 %v562, %v578
      %v584 = vadd.f32 %v563, %v580
      %s585 = sld [smem:[#allocation8 + $0x15]]
      %v586 = vstv %s585
      %v587 = vmul.f32 %v586, %v169
      %v588 = vmul.f32 %v586, %v165
      %v589 = vmul.f32 %v586, %v170
      %vm593 = vcmask 1044480
      %v594 = vrot.slane %v587, 3
      %v595 = vrot.slane %v588, 3
      %v596 = vsel %vm593, %v594, %v595
      %v597 = vrot.slane %v589, 3
      %v598 = vsel %vm593, %v595, %v597
      %v601 = vadd.f32 %v583, %v596
      %v602 = vadd.f32 %v584, %v598
      %s603 = sld [smem:[#allocation8 + $0x16]]
      %v604 = vstv %s603
      %v605 = vmul.f32 %v604, %v169
      %v606 = vmul.f32 %v604, %v165
      %v607 = vmul.f32 %v604, %v170
      %v611 = vrot.slane %v605, 3
      %v612 = vrot.slane %v606, 3
      %v613 = vsel %vm593, %v611, %v612
      %v614 = vrot.slane %v607, 3
      %v615 = vsel %vm593, %v612, %v614
      %616 = vrot.lane.b32.xlu0 %v613, 127
      %v617 = vpop.permute.xlu0 %616
      %618 = vrot.lane.b32.xlu0 %v615, 127
      %v619 = vpop.permute.xlu0 %618
      %v622 = vadd.f32 %v601, %v617
      %v623 = vadd.f32 %v602, %v619
      %s624 = sld [smem:[#allocation8 + $0x17]]
      %v625 = vstv %s624
      %v626 = vmul.f32 %v625, %v169
      %v627 = vmul.f32 %v625, %v165
      %v628 = vmul.f32 %v625, %v170
      %v632 = vrot.slane %v626, 3
      %v633 = vrot.slane %v627, 3
      %v634 = vsel %vm593, %v632, %v633
      %v635 = vrot.slane %v628, 3
      %v636 = vsel %vm593, %v633, %v635
      %637 = vrot.lane.b32.xlu0 %v634, 126
      %v638 = vpop.permute.xlu0 %637
      %639 = vrot.lane.b32.xlu0 %v636, 126
      %v640 = vpop.permute.xlu0 %639
      %v643 = vadd.f32 %v622, %v638
      %v644 = vadd.f32 %v623, %v640
      %s645 = sld [smem:[#allocation8 + $0x18]]
      %v646 = vstv %s645
      %v647 = vmul.f32 %v646, %v169
      %v648 = vmul.f32 %v646, %v165
      %v649 = vmul.f32 %v646, %v170
      %v653 = vrot.slane %v647, 3
      %v654 = vrot.slane %v648, 3
      %v655 = vsel %vm593, %v653, %v654
      %v656 = vrot.slane %v649, 3
      %v657 = vsel %vm593, %v654, %v656
      %658 = vrot.lane.b32.xlu0 %v655, 125
      %v659 = vpop.permute.xlu0 %658
      %660 = vrot.lane.b32.xlu0 %v657, 125
      %v661 = vpop.permute.xlu0 %660
      %v664 = vadd.f32 %v643, %v659
      %v665 = vadd.f32 %v644, %v661
      %s666 = sld [smem:[#allocation8 + $0x19]]
      %v667 = vstv %s666
      %v668 = vmul.f32 %v667, %v169
      %v669 = vmul.f32 %v667, %v165
      %v670 = vmul.f32 %v667, %v170
      %v674 = vrot.slane %v668, 3
      %v675 = vrot.slane %v669, 3
      %v676 = vsel %vm593, %v674, %v675
      %v677 = vrot.slane %v670, 3
      %v678 = vsel %vm593, %v675, %v677
      %679 = vrot.lane.b32.xlu0 %v676, 124
      %v680 = vpop.permute.xlu0 %679
      %681 = vrot.lane.b32.xlu0 %v678, 124
      %v682 = vpop.permute.xlu0 %681
      %v685 = vadd.f32 %v664, %v680
      %v686 = vadd.f32 %v665, %v682
      %s687 = sld [smem:[#allocation8 + $0x1a]]
      %v688 = vstv %s687
      %v689 = vmul.f32 %v688, %v169
      %v690 = vmul.f32 %v688, %v165
      %v691 = vmul.f32 %v688, %v170
      %v695 = vrot.slane %v689, 3
      %v696 = vrot.slane %v690, 3
      %v697 = vsel %vm593, %v695, %v696
      %v698 = vrot.slane %v691, 3
      %v699 = vsel %vm593, %v696, %v698
      %700 = vrot.lane.b32.xlu0 %v697, 123
      %v701 = vpop.permute.xlu0 %700
      %702 = vrot.lane.b32.xlu0 %v699, 123
      %v703 = vpop.permute.xlu0 %702
      %v706 = vadd.f32 %v685, %v701
      %v707 = vadd.f32 %v686, %v703
      %s708 = sld [smem:[#allocation8 + $0x1b]]
      %v709 = vstv %s708
      %v710 = vmul.f32 %v709, %v169
      %v711 = vmul.f32 %v709, %v165
      %v712 = vmul.f32 %v709, %v170
      %v716 = vrot.slane %v710, 3
      %v717 = vrot.slane %v711, 3
      %v718 = vsel %vm593, %v716, %v717
      %v719 = vrot.slane %v712, 3
      %v720 = vsel %vm593, %v717, %v719
      %721 = vrot.lane.b32.xlu0 %v718, 122
      %v722 = vpop.permute.xlu0 %721
      %723 = vrot.lane.b32.xlu0 %v720, 122
      %v724 = vpop.permute.xlu0 %723
      %v727 = vadd.f32 %v706, %v722
      %v728 = vadd.f32 %v707, %v724
      %s729 = sld [smem:[#allocation8 + $0x1c]]
      %v730 = vstv %s729
      %v731 = vmul.f32 %v730, %v169
      %v732 = vmul.f32 %v730, %v165
      %v733 = vmul.f32 %v730, %v170
      %vm737 = vcmask 1043456
      %v738 = vrot.slane %v731, 4
      %v739 = vrot.slane %v732, 4
      %v740 = vsel %vm737, %v738, %v739
      %v741 = vrot.slane %v733, 4
      %v742 = vsel %vm737, %v739, %v741
      %v745 = vadd.f32 %v727, %v740
      %v746 = vadd.f32 %v728, %v742
      %s747 = sld [smem:[#allocation8 + $0x1d]]
      %v748 = vstv %s747
      %v749 = vmul.f32 %v748, %v169
      %v750 = vmul.f32 %v748, %v165
      %v751 = vmul.f32 %v748, %v170
      %v755 = vrot.slane %v749, 4
      %v756 = vrot.slane %v750, 4
      %v757 = vsel %vm737, %v755, %v756
      %v758 = vrot.slane %v751, 4
      %v759 = vsel %vm737, %v756, %v758
      %760 = vrot.lane.b32.xlu0 %v757, 127
      %v761 = vpop.permute.xlu0 %760
      %762 = vrot.lane.b32.xlu0 %v759, 127
      %v763 = vpop.permute.xlu0 %762
      %v766 = vadd.f32 %v745, %v761
      %v767 = vadd.f32 %v746, %v763
      %s768 = sld [smem:[#allocation8 + $0x1e]]
      %v769 = vstv %s768
      %v770 = vmul.f32 %v769, %v169
      %v771 = vmul.f32 %v769, %v165
      %v772 = vmul.f32 %v769, %v170
      %v776 = vrot.slane %v770, 4
      %v777 = vrot.slane %v771, 4
      %v778 = vsel %vm737, %v776, %v777
      %v779 = vrot.slane %v772, 4
      %v780 = vsel %vm737, %v777, %v779
      %781 = vrot.lane.b32.xlu0 %v778, 126
      %v782 = vpop.permute.xlu0 %781
      %783 = vrot.lane.b32.xlu0 %v780, 126
      %v784 = vpop.permute.xlu0 %783
      %v787 = vadd.f32 %v766, %v782
      %v788 = vadd.f32 %v767, %v784
      %s789 = sld [smem:[#allocation8 + $0x1f]]
      %v790 = vstv %s789
      %v791 = vmul.f32 %v790, %v169
      %v792 = vmul.f32 %v790, %v165
      %v793 = vmul.f32 %v790, %v170
      %v797 = vrot.slane %v791, 4
      %v798 = vrot.slane %v792, 4
      %v799 = vsel %vm737, %v797, %v798
      %v800 = vrot.slane %v793, 4
      %v801 = vsel %vm737, %v798, %v800
      %802 = vrot.lane.b32.xlu0 %v799, 125
      %v803 = vpop.permute.xlu0 %802
      %804 = vrot.lane.b32.xlu0 %v801, 125
      %v805 = vpop.permute.xlu0 %804
      %v808 = vadd.f32 %v787, %v803
      %v809 = vadd.f32 %v788, %v805
      %s810 = sld [smem:[#allocation8 + $0x20]]
      %v811 = vstv %s810
      %v812 = vmul.f32 %v811, %v169
      %v813 = vmul.f32 %v811, %v165
      %v814 = vmul.f32 %v811, %v170
      %v818 = vrot.slane %v812, 4
      %v819 = vrot.slane %v813, 4
      %v820 = vsel %vm737, %v818, %v819
      %v821 = vrot.slane %v814, 4
      %v822 = vsel %vm737, %v819, %v821
      %823 = vrot.lane.b32.xlu0 %v820, 124
      %v824 = vpop.permute.xlu0 %823
      %825 = vrot.lane.b32.xlu0 %v822, 124
      %v826 = vpop.permute.xlu0 %825
      %v829 = vadd.f32 %v808, %v824
      %v830 = vadd.f32 %v809, %v826
      %s831 = sld [smem:[#allocation8 + $0x21]]
      %v832 = vstv %s831
      %v833 = vmul.f32 %v832, %v169
      %v834 = vmul.f32 %v832, %v165
      %v835 = vmul.f32 %v832, %v170
      %v839 = vrot.slane %v833, 4
      %v840 = vrot.slane %v834, 4
      %v841 = vsel %vm737, %v839, %v840
      %v842 = vrot.slane %v835, 4
      %v843 = vsel %vm737, %v840, %v842
      %844 = vrot.lane.b32.xlu0 %v841, 123
      %v845 = vpop.permute.xlu0 %844
      %846 = vrot.lane.b32.xlu0 %v843, 123
      %v847 = vpop.permute.xlu0 %846
      %v850 = vadd.f32 %v829, %v845
      %v851 = vadd.f32 %v830, %v847
      %s852 = sld [smem:[#allocation8 + $0x22]]
      %v853 = vstv %s852
      %v854 = vmul.f32 %v853, %v169
      %v855 = vmul.f32 %v853, %v165
      %v856 = vmul.f32 %v853, %v170
      %v860 = vrot.slane %v854, 4
      %v861 = vrot.slane %v855, 4
      %v862 = vsel %vm737, %v860, %v861
      %v863 = vrot.slane %v856, 4
      %v864 = vsel %vm737, %v861, %v863
      %865 = vrot.lane.b32.xlu0 %v862, 122
      %v866 = vpop.permute.xlu0 %865
      %867 = vrot.lane.b32.xlu0 %v864, 122
      %v868 = vpop.permute.xlu0 %867
      %v871 = vadd.f32 %v850, %v866
      %v872 = vadd.f32 %v851, %v868
      %s873 = sld [smem:[#allocation8 + $0x23]]
      %v874 = vstv %s873
      %v875 = vmul.f32 %v874, %v169
      %v876 = vmul.f32 %v874, %v165
      %v877 = vmul.f32 %v874, %v170
      %v881 = vrot.slane %v875, 5
      %v882 = vrot.slane %v876, 5
      %v883 = vsel %vm162, %v881, %v882
      %v884 = vrot.slane %v877, 5
      %v885 = vsel %vm162, %v882, %v884
      %v888 = vadd.f32 %v871, %v883
      %v889 = vadd.f32 %v872, %v885
      %s890 = sld [smem:[#allocation8 + $0x24]]
      %v891 = vstv %s890
      %v892 = vmul.f32 %v891, %v169
      %v893 = vmul.f32 %v891, %v165
      %v894 = vmul.f32 %v891, %v170
      %v898 = vrot.slane %v892, 5
      %v899 = vrot.slane %v893, 5
      %v900 = vsel %vm162, %v898, %v899
      %v901 = vrot.slane %v894, 5
      %v902 = vsel %vm162, %v899, %v901
      %903 = vrot.lane.b32.xlu0 %v900, 127
      %v904 = vpop.permute.xlu0 %903
      %905 = vrot.lane.b32.xlu0 %v902, 127
      %v906 = vpop.permute.xlu0 %905
      %v909 = vadd.f32 %v888, %v904
      %v910 = vadd.f32 %v889, %v906
      %s911 = sld [smem:[#allocation8 + $0x25]]
      %v912 = vstv %s911
      %v913 = vmul.f32 %v912, %v169
      %v914 = vmul.f32 %v912, %v165
      %v915 = vmul.f32 %v912, %v170
      %v919 = vrot.slane %v913, 5
      %v920 = vrot.slane %v914, 5
      %v921 = vsel %vm162, %v919, %v920
      %v922 = vrot.slane %v915, 5
      %v923 = vsel %vm162, %v920, %v922
      %924 = vrot.lane.b32.xlu0 %v921, 126
      %v925 = vpop.permute.xlu0 %924
      %926 = vrot.lane.b32.xlu0 %v923, 126
      %v927 = vpop.permute.xlu0 %926
      %v930 = vadd.f32 %v909, %v925
      %v931 = vadd.f32 %v910, %v927
      %s932 = sld [smem:[#allocation8 + $0x26]]
      %v933 = vstv %s932
      %v934 = vmul.f32 %v933, %v169
      %v935 = vmul.f32 %v933, %v165
      %v936 = vmul.f32 %v933, %v170
      %v940 = vrot.slane %v934, 5
      %v941 = vrot.slane %v935, 5
      %v942 = vsel %vm162, %v940, %v941
      %v943 = vrot.slane %v936, 5
      %v944 = vsel %vm162, %v941, %v943
      %945 = vrot.lane.b32.xlu0 %v942, 125
      %v946 = vpop.permute.xlu0 %945
      %947 = vrot.lane.b32.xlu0 %v944, 125
      %v948 = vpop.permute.xlu0 %947
      %v951 = vadd.f32 %v930, %v946
      %v952 = vadd.f32 %v931, %v948
      %s953 = sld [smem:[#allocation8 + $0x27]]
      %v954 = vstv %s953
      %v955 = vmul.f32 %v954, %v169
      %v956 = vmul.f32 %v954, %v165
      %v957 = vmul.f32 %v954, %v170
      %v961 = vrot.slane %v955, 5
      %v962 = vrot.slane %v956, 5
      %v963 = vsel %vm162, %v961, %v962
      %v964 = vrot.slane %v957, 5
      %v965 = vsel %vm162, %v962, %v964
      %966 = vrot.lane.b32.xlu0 %v963, 124
      %v967 = vpop.permute.xlu0 %966
      %968 = vrot.lane.b32.xlu0 %v965, 124
      %v969 = vpop.permute.xlu0 %968
      %v972 = vadd.f32 %v951, %v967
      %v973 = vadd.f32 %v952, %v969
      %s974 = sld [smem:[#allocation8 + $0x28]]
      %v975 = vstv %s974
      %v976 = vmul.f32 %v975, %v169
      %v977 = vmul.f32 %v975, %v165
      %v978 = vmul.f32 %v975, %v170
      %v982 = vrot.slane %v976, 5
      %v983 = vrot.slane %v977, 5
      %v984 = vsel %vm162, %v982, %v983
      %v985 = vrot.slane %v978, 5
      %v986 = vsel %vm162, %v983, %v985
      %987 = vrot.lane.b32.xlu0 %v984, 123
      %v988 = vpop.permute.xlu0 %987
      %989 = vrot.lane.b32.xlu0 %v986, 123
      %v990 = vpop.permute.xlu0 %989
      %v993 = vadd.f32 %v972, %v988
      %v994 = vadd.f32 %v973, %v990
      %s995 = sld [smem:[#allocation8 + $0x29]]
      %v996 = vstv %s995
      %v997 = vmul.f32 %v996, %v169
      %v998 = vmul.f32 %v996, %v165
      %v999 = vmul.f32 %v996, %v170
      %v1003 = vrot.slane %v997, 5
      %v1004 = vrot.slane %v998, 5
      %v1005 = vsel %vm162, %v1003, %v1004
      %v1006 = vrot.slane %v999, 5
      %v1007 = vsel %vm162, %v1004, %v1006
      %1008 = vrot.lane.b32.xlu0 %v1005, 122
      %v1009 = vpop.permute.xlu0 %1008
      %1010 = vrot.lane.b32.xlu0 %v1007, 122
      %v1011 = vpop.permute.xlu0 %1010
      %v1014 = vadd.f32 %v993, %v1009
      %v1015 = vadd.f32 %v994, %v1011
      %s1016 = sld [smem:[#allocation8 + $0x2a]]
      %v1017 = vstv %s1016
      %v1018 = vmul.f32 %v1017, %v169
      %v1019 = vmul.f32 %v1017, %v165
      %v1020 = vmul.f32 %v1017, %v170
      %vm1024 = vcmask 1041408
      %v1025 = vrot.slane %v1018, 6
      %v1026 = vrot.slane %v1019, 6
      %v1027 = vsel %vm1024, %v1025, %v1026
      %v1028 = vrot.slane %v1020, 6
      %v1029 = vsel %vm1024, %v1026, %v1028
      %v1032 = vadd.f32 %v1014, %v1027
      %v1033 = vadd.f32 %v1015, %v1029
      %s1034 = sld [smem:[#allocation8 + $0x2b]]
      %v1035 = vstv %s1034
      %v1036 = vmul.f32 %v1035, %v169
      %v1037 = vmul.f32 %v1035, %v165
      %v1038 = vmul.f32 %v1035, %v170
      %v1042 = vrot.slane %v1036, 6
      %v1043 = vrot.slane %v1037, 6
      %v1044 = vsel %vm1024, %v1042, %v1043
      %v1045 = vrot.slane %v1038, 6
      %v1046 = vsel %vm1024, %v1043, %v1045
      %1047 = vrot.lane.b32.xlu0 %v1044, 127
      %v1048 = vpop.permute.xlu0 %1047
      %1049 = vrot.lane.b32.xlu0 %v1046, 127
      %v1050 = vpop.permute.xlu0 %1049
      %v1053 = vadd.f32 %v1032, %v1048
      %v1054 = vadd.f32 %v1033, %v1050
      %s1055 = sld [smem:[#allocation8 + $0x2c]]
      %v1056 = vstv %s1055
      %v1057 = vmul.f32 %v1056, %v169
      %v1058 = vmul.f32 %v1056, %v165
      %v1059 = vmul.f32 %v1056, %v170
      %v1063 = vrot.slane %v1057, 6
      %v1064 = vrot.slane %v1058, 6
      %v1065 = vsel %vm1024, %v1063, %v1064
      %v1066 = vrot.slane %v1059, 6
      %v1067 = vsel %vm1024, %v1064, %v1066
      %1068 = vrot.lane.b32.xlu0 %v1065, 126
      %v1069 = vpop.permute.xlu0 %1068
      %1070 = vrot.lane.b32.xlu0 %v1067, 126
      %v1071 = vpop.permute.xlu0 %1070
      %v1074 = vadd.f32 %v1053, %v1069
      %v1075 = vadd.f32 %v1054, %v1071
      %s1076 = sld [smem:[#allocation8 + $0x2d]]
      %v1077 = vstv %s1076
      %v1078 = vmul.f32 %v1077, %v169
      %v1079 = vmul.f32 %v1077, %v165
      %v1080 = vmul.f32 %v1077, %v170
      %v1084 = vrot.slane %v1078, 6
      %v1085 = vrot.slane %v1079, 6
      %v1086 = vsel %vm1024, %v1084, %v1085
      %v1087 = vrot.slane %v1080, 6
      %v1088 = vsel %vm1024, %v1085, %v1087
      %1089 = vrot.lane.b32.xlu0 %v1086, 125
      %v1090 = vpop.permute.xlu0 %1089
      %1091 = vrot.lane.b32.xlu0 %v1088, 125
      %v1092 = vpop.permute.xlu0 %1091
      %v1095 = vadd.f32 %v1074, %v1090
      %v1096 = vadd.f32 %v1075, %v1092
      %s1097 = sld [smem:[#allocation8 + $0x2e]]
      %v1098 = vstv %s1097
      %v1099 = vmul.f32 %v1098, %v169
      %v1100 = vmul.f32 %v1098, %v165
      %v1101 = vmul.f32 %v1098, %v170
      %v1105 = vrot.slane %v1099, 6
      %v1106 = vrot.slane %v1100, 6
      %v1107 = vsel %vm1024, %v1105, %v1106
      %v1108 = vrot.slane %v1101, 6
      %v1109 = vsel %vm1024, %v1106, %v1108
      %1110 = vrot.lane.b32.xlu0 %v1107, 124
      %v1111 = vpop.permute.xlu0 %1110
      %1112 = vrot.lane.b32.xlu0 %v1109, 124
      %v1113 = vpop.permute.xlu0 %1112
      %v1116 = vadd.f32 %v1095, %v1111
      %v1117 = vadd.f32 %v1096, %v1113
      %s1118 = sld [smem:[#allocation8 + $0x2f]]
      %v1119 = vstv %s1118
      %v1120 = vmul.f32 %v1119, %v169
      %v1121 = vmul.f32 %v1119, %v165
      %v1122 = vmul.f32 %v1119, %v170
      %v1126 = vrot.slane %v1120, 6
      %v1127 = vrot.slane %v1121, 6
      %v1128 = vsel %vm1024, %v1126, %v1127
      %v1129 = vrot.slane %v1122, 6
      %v1130 = vsel %vm1024, %v1127, %v1129
      %1131 = vrot.lane.b32.xlu0 %v1128, 123
      %v1132 = vpop.permute.xlu0 %1131
      %1133 = vrot.lane.b32.xlu0 %v1130, 123
      %v1134 = vpop.permute.xlu0 %1133
      %v1137 = vadd.f32 %v1116, %v1132
      %v1138 = vadd.f32 %v1117, %v1134
      %s1139 = sld [smem:[#allocation8 + $0x30]]
      %v1140 = vstv %s1139
      %v1141 = vmul.f32 %v1140, %v169
      %v1142 = vmul.f32 %v1140, %v165
      %v1143 = vmul.f32 %v1140, %v170
      %v1147 = vrot.slane %v1141, 6
      %v1148 = vrot.slane %v1142, 6
      %v1149 = vsel %vm1024, %v1147, %v1148
      %v1150 = vrot.slane %v1143, 6
      %v1151 = vsel %vm1024, %v1148, %v1150
      %1152 = vrot.lane.b32.xlu0 %v1149, 122
      %v1153 = vpop.permute.xlu0 %1152
      %1154 = vrot.lane.b32.xlu0 %v1151, 122
      %v1155 = vpop.permute.xlu0 %1154
      %v1158 = vadd.f32 %v1137, %v1153
      %v1159 = vadd.f32 %v1138, %v1155
      %s1160 = sld [smem:[#allocation8 + $0x31]]
      %v1161 = vstv %s1160
      %v1162 = vmul.f32 %v1161, %v205
      %v1163 = vmul.f32 %v1161, %v201
      %v1164 = vadd.f32 %v1158, %v1162
      %v1165 = vadd.f32 %v1159, %v1163
      %s1166 = sld [smem:[#allocation8 + $0x32]]
      %v1167 = vstv %s1166
      %v1168 = vmul.f32 %v1167, %v205
      %v1169 = vmul.f32 %v1167, %v201
      %1172 = vrot.lane.b32.xlu0 %v1168, 127
      %v1173 = vpop.permute.xlu0 %1172
      %1174 = vrot.lane.b32.xlu0 %v1169, 127
      %v1175 = vpop.permute.xlu0 %1174
      %v1178 = vadd.f32 %v1164, %v1173
      %v1179 = vadd.f32 %v1165, %v1175
      %s1180 = sld [smem:[#allocation8 + $0x33]]
      %v1181 = vstv %s1180
      %v1182 = vmul.f32 %v1181, %v205
      %v1183 = vmul.f32 %v1181, %v201
      %1186 = vrot.lane.b32.xlu0 %v1182, 126
      %v1187 = vpop.permute.xlu0 %1186
      %1188 = vrot.lane.b32.xlu0 %v1183, 126
      %v1189 = vpop.permute.xlu0 %1188
      %v1192 = vadd.f32 %v1178, %v1187
      %v1193 = vadd.f32 %v1179, %v1189
      %s1194 = sld [smem:[#allocation8 + $0x34]]
      %v1195 = vstv %s1194
      %v1196 = vmul.f32 %v1195, %v205
      %v1197 = vmul.f32 %v1195, %v201
      %1200 = vrot.lane.b32.xlu0 %v1196, 125
      %v1201 = vpop.permute.xlu0 %1200
      %1202 = vrot.lane.b32.xlu0 %v1197, 125
      %v1203 = vpop.permute.xlu0 %1202
      %v1206 = vadd.f32 %v1192, %v1201
      %v1207 = vadd.f32 %v1193, %v1203
      %s1208 = sld [smem:[#allocation8 + $0x35]]
      %v1209 = vstv %s1208
      %v1210 = vmul.f32 %v1209, %v205
      %v1211 = vmul.f32 %v1209, %v201
      %1214 = vrot.lane.b32.xlu0 %v1210, 124
      %v1215 = vpop.permute.xlu0 %1214
      %1216 = vrot.lane.b32.xlu0 %v1211, 124
      %v1217 = vpop.permute.xlu0 %1216
      %v1220 = vadd.f32 %v1206, %v1215
      %v1221 = vadd.f32 %v1207, %v1217
      %s1222 = sld [smem:[#allocation8 + $0x36]]
      %v1223 = vstv %s1222
      %v1224 = vmul.f32 %v1223, %v205
      %v1225 = vmul.f32 %v1223, %v201
      %1228 = vrot.lane.b32.xlu0 %v1224, 123
      %v1229 = vpop.permute.xlu0 %1228
      %1230 = vrot.lane.b32.xlu0 %v1225, 123
      %v1231 = vpop.permute.xlu0 %1230
      %v1234 = vadd.f32 %v1220, %v1229
      %v1235 = vadd.f32 %v1221, %v1231
      %s1236 = sld [smem:[#allocation8 + $0x37]]
      %v1237 = vstv %s1236
      %v1238 = vmul.f32 %v1237, %v205
      %v1239 = vmul.f32 %v1237, %v201
      %1242 = vrot.lane.b32.xlu0 %v1238, 122
      %v1243 = vpop.permute.xlu0 %1242
      %1244 = vrot.lane.b32.xlu0 %v1239, 122
      %v1245 = vpop.permute.xlu0 %1244
      %v1248 = vadd.f32 %v1234, %v1243
      %v1249 = vadd.f32 %v1235, %v1245
      %s1250 = sld [smem:[#allocation8 + $0x38]]
      %v1251 = vstv %s1250
      %v1252 = vmul.f32 %v1251, %v205
      %v1253 = vmul.f32 %v1251, %v201
      %v1254 = vmul.f32 %v1251, %v206
      %v1258 = vrot.slane %v1252, 1
      %v1259 = vrot.slane %v1253, 1
      %v1260 = vsel %vm305, %v1258, %v1259
      %v1261 = vrot.slane %v1254, 1
      %v1262 = vsel %vm305, %v1259, %v1261
      %v1265 = vadd.f32 %v1248, %v1260
      %v1266 = vadd.f32 %v1249, %v1262
      %s1267 = sld [smem:[#allocation8 + $0x39]]
      %v1268 = vstv %s1267
      %v1269 = vmul.f32 %v1268, %v205
      %v1270 = vmul.f32 %v1268, %v201
      %v1271 = vmul.f32 %v1268, %v206
      %v1275 = vrot.slane %v1269, 1
      %v1276 = vrot.slane %v1270, 1
      %v1277 = vsel %vm305, %v1275, %v1276
      %v1278 = vrot.slane %v1271, 1
      %v1279 = vsel %vm305, %v1276, %v1278
      %1280 = vrot.lane.b32.xlu0 %v1277, 127
      %v1281 = vpop.permute.xlu0 %1280
      %1282 = vrot.lane.b32.xlu0 %v1279, 127
      %v1283 = vpop.permute.xlu0 %1282
      %v1286 = vadd.f32 %v1265, %v1281
      %v1287 = vadd.f32 %v1266, %v1283
      %s1288 = sld [smem:[#allocation8 + $0x3a]]
      %v1289 = vstv %s1288
      %v1290 = vmul.f32 %v1289, %v205
      %v1291 = vmul.f32 %v1289, %v201
      %v1292 = vmul.f32 %v1289, %v206
      %v1296 = vrot.slane %v1290, 1
      %v1297 = vrot.slane %v1291, 1
      %v1298 = vsel %vm305, %v1296, %v1297
      %v1299 = vrot.slane %v1292, 1
      %v1300 = vsel %vm305, %v1297, %v1299
      %1301 = vrot.lane.b32.xlu0 %v1298, 126
      %v1302 = vpop.permute.xlu0 %1301
      %1303 = vrot.lane.b32.xlu0 %v1300, 126
      %v1304 = vpop.permute.xlu0 %1303
      %v1307 = vadd.f32 %v1286, %v1302
      %v1308 = vadd.f32 %v1287, %v1304
      %s1309 = sld [smem:[#allocation8 + $0x3b]]
      %v1310 = vstv %s1309
      %v1311 = vmul.f32 %v1310, %v205
      %v1312 = vmul.f32 %v1310, %v201
      %v1313 = vmul.f32 %v1310, %v206
      %v1317 = vrot.slane %v1311, 1
      %v1318 = vrot.slane %v1312, 1
      %v1319 = vsel %vm305, %v1317, %v1318
      %v1320 = vrot.slane %v1313, 1
      %v1321 = vsel %vm305, %v1318, %v1320
      %1322 = vrot.lane.b32.xlu0 %v1319, 125
      %v1323 = vpop.permute.xlu0 %1322
      %1324 = vrot.lane.b32.xlu0 %v1321, 125
      %v1325 = vpop.permute.xlu0 %1324
      %v1328 = vadd.f32 %v1307, %v1323
      %v1329 = vadd.f32 %v1308, %v1325
      %s1330 = sld [smem:[#allocation8 + $0x3c]]
      %v1331 = vstv %s1330
      %v1332 = vmul.f32 %v1331, %v205
      %v1333 = vmul.f32 %v1331, %v201
      %v1334 = vmul.f32 %v1331, %v206
      %v1338 = vrot.slane %v1332, 1
      %v1339 = vrot.slane %v1333, 1
      %v1340 = vsel %vm305, %v1338, %v1339
      %v1341 = vrot.slane %v1334, 1
      %v1342 = vsel %vm305, %v1339, %v1341
      %1343 = vrot.lane.b32.xlu0 %v1340, 124
      %v1344 = vpop.permute.xlu0 %1343
      %1345 = vrot.lane.b32.xlu0 %v1342, 124
      %v1346 = vpop.permute.xlu0 %1345
      %v1349 = vadd.f32 %v1328, %v1344
      %v1350 = vadd.f32 %v1329, %v1346
      %s1351 = sld [smem:[#allocation8 + $0x3d]]
      %v1352 = vstv %s1351
      %v1353 = vmul.f32 %v1352, %v205
      %v1354 = vmul.f32 %v1352, %v201
      %v1355 = vmul.f32 %v1352, %v206
      %v1359 = vrot.slane %v1353, 1
      %v1360 = vrot.slane %v1354, 1
      %v1361 = vsel %vm305, %v1359, %v1360
      %v1362 = vrot.slane %v1355, 1
      %v1363 = vsel %vm305, %v1360, %v1362
      %1364 = vrot.lane.b32.xlu0 %v1361, 123
      %v1365 = vpop.permute.xlu0 %1364
      %1366 = vrot.lane.b32.xlu0 %v1363, 123
      %v1367 = vpop.permute.xlu0 %1366
      %v1370 = vadd.f32 %v1349, %v1365
      %v1371 = vadd.f32 %v1350, %v1367
      %s1372 = sld [smem:[#allocation8 + $0x3e]]
      %v1373 = vstv %s1372
      %v1374 = vmul.f32 %v1373, %v205
      %v1375 = vmul.f32 %v1373, %v201
      %v1376 = vmul.f32 %v1373, %v206
      %v1380 = vrot.slane %v1374, 1
      %v1381 = vrot.slane %v1375, 1
      %v1382 = vsel %vm305, %v1380, %v1381
      %v1383 = vrot.slane %v1376, 1
      %v1384 = vsel %vm305, %v1381, %v1383
      %1385 = vrot.lane.b32.xlu0 %v1382, 122
      %v1386 = vpop.permute.xlu0 %1385
      %1387 = vrot.lane.b32.xlu0 %v1384, 122
      %v1388 = vpop.permute.xlu0 %1387
      %v1391 = vadd.f32 %v1370, %v1386
      %v1392 = vadd.f32 %v1371, %v1388
      %s1393 = sld [smem:[#allocation8 + $0x3f]]
      %v1394 = vstv %s1393
      %v1395 = vmul.f32 %v1394, %v205
      %v1396 = vmul.f32 %v1394, %v201
      %v1397 = vmul.f32 %v1394, %v206
      %v1401 = vrot.slane %v1395, 2
      %v1402 = vrot.slane %v1396, 2
      %v1403 = vsel %vm449, %v1401, %v1402
      %v1404 = vrot.slane %v1397, 2
      %v1405 = vsel %vm449, %v1402, %v1404
      %v1408 = vadd.f32 %v1391, %v1403
      %v1409 = vadd.f32 %v1392, %v1405
      %s1410 = sld [smem:[#allocation8 + $0x40]]
      %v1411 = vstv %s1410
      %v1412 = vmul.f32 %v1411, %v205
      %v1413 = vmul.f32 %v1411, %v201
      %v1414 = vmul.f32 %v1411, %v206
      %v1418 = vrot.slane %v1412, 2
      %v1419 = vrot.slane %v1413, 2
      %v1420 = vsel %vm449, %v1418, %v1419
      %v1421 = vrot.slane %v1414, 2
      %v1422 = vsel %vm449, %v1419, %v1421
      %1423 = vrot.lane.b32.xlu0 %v1420, 127
      %v1424 = vpop.permute.xlu0 %1423
      %1425 = vrot.lane.b32.xlu0 %v1422, 127
      %v1426 = vpop.permute.xlu0 %1425
      %v1429 = vadd.f32 %v1408, %v1424
      %v1430 = vadd.f32 %v1409, %v1426
      %s1431 = sld [smem:[#allocation8 + $0x41]]
      %v1432 = vstv %s1431
      %v1433 = vmul.f32 %v1432, %v205
      %v1434 = vmul.f32 %v1432, %v201
      %v1435 = vmul.f32 %v1432, %v206
      %v1439 = vrot.slane %v1433, 2
      %v1440 = vrot.slane %v1434, 2
      %v1441 = vsel %vm449, %v1439, %v1440
      %v1442 = vrot.slane %v1435, 2
      %v1443 = vsel %vm449, %v1440, %v1442
      %1444 = vrot.lane.b32.xlu0 %v1441, 126
      %v1445 = vpop.permute.xlu0 %1444
      %1446 = vrot.lane.b32.xlu0 %v1443, 126
      %v1447 = vpop.permute.xlu0 %1446
      %v1450 = vadd.f32 %v1429, %v1445
      %v1451 = vadd.f32 %v1430, %v1447
      %s1452 = sld [smem:[#allocation8 + $0x42]]
      %v1453 = vstv %s1452
      %v1454 = vmul.f32 %v1453, %v205
      %v1455 = vmul.f32 %v1453, %v201
      %v1456 = vmul.f32 %v1453, %v206
      %v1460 = vrot.slane %v1454, 2
      %v1461 = vrot.slane %v1455, 2
      %v1462 = vsel %vm449, %v1460, %v1461
      %v1463 = vrot.slane %v1456, 2
      %v1464 = vsel %vm449, %v1461, %v1463
      %1465 = vrot.lane.b32.xlu0 %v1462, 125
      %v1466 = vpop.permute.xlu0 %1465
      %1467 = vrot.lane.b32.xlu0 %v1464, 125
      %v1468 = vpop.permute.xlu0 %1467
      %v1471 = vadd.f32 %v1450, %v1466
      %v1472 = vadd.f32 %v1451, %v1468
      %s1473 = sld [smem:[#allocation8 + $0x43]]
      %v1474 = vstv %s1473
      %v1475 = vmul.f32 %v1474, %v205
      %v1476 = vmul.f32 %v1474, %v201
      %v1477 = vmul.f32 %v1474, %v206
      %v1481 = vrot.slane %v1475, 2
      %v1482 = vrot.slane %v1476, 2
      %v1483 = vsel %vm449, %v1481, %v1482
      %v1484 = vrot.slane %v1477, 2
      %v1485 = vsel %vm449, %v1482, %v1484
      %1486 = vrot.lane.b32.xlu0 %v1483, 124
      %v1487 = vpop.permute.xlu0 %1486
      %1488 = vrot.lane.b32.xlu0 %v1485, 124
      %v1489 = vpop.permute.xlu0 %1488
      %v1492 = vadd.f32 %v1471, %v1487
      %v1493 = vadd.f32 %v1472, %v1489
      %s1494 = sld [smem:[#allocation8 + $0x44]]
      %v1495 = vstv %s1494
      %v1496 = vmul.f32 %v1495, %v205
      %v1497 = vmul.f32 %v1495, %v201
      %v1498 = vmul.f32 %v1495, %v206
      %v1502 = vrot.slane %v1496, 2
      %v1503 = vrot.slane %v1497, 2
      %v1504 = vsel %vm449, %v1502, %v1503
      %v1505 = vrot.slane %v1498, 2
      %v1506 = vsel %vm449, %v1503, %v1505
      %1507 = vrot.lane.b32.xlu0 %v1504, 123
      %v1508 = vpop.permute.xlu0 %1507
      %1509 = vrot.lane.b32.xlu0 %v1506, 123
      %v1510 = vpop.permute.xlu0 %1509
      %v1513 = vadd.f32 %v1492, %v1508
      %v1514 = vadd.f32 %v1493, %v1510
      %s1515 = sld [smem:[#allocation8 + $0x45]]
      %v1516 = vstv %s1515
      %v1517 = vmul.f32 %v1516, %v205
      %v1518 = vmul.f32 %v1516, %v201
      %v1519 = vmul.f32 %v1516, %v206
      %v1523 = vrot.slane %v1517, 2
      %v1524 = vrot.slane %v1518, 2
      %v1525 = vsel %vm449, %v1523, %v1524
      %v1526 = vrot.slane %v1519, 2
      %v1527 = vsel %vm449, %v1524, %v1526
      %1528 = vrot.lane.b32.xlu0 %v1525, 122
      %v1529 = vpop.permute.xlu0 %1528
      %1530 = vrot.lane.b32.xlu0 %v1527, 122
      %v1531 = vpop.permute.xlu0 %1530
      %v1534 = vadd.f32 %v1513, %v1529
      %v1535 = vadd.f32 %v1514, %v1531
      %s1536 = sld [smem:[#allocation8 + $0x46]]
      %v1537 = vstv %s1536
      %v1538 = vmul.f32 %v1537, %v205
      %v1539 = vmul.f32 %v1537, %v201
      %v1540 = vmul.f32 %v1537, %v206
      %v1544 = vrot.slane %v1538, 3
      %v1545 = vrot.slane %v1539, 3
      %v1546 = vsel %vm593, %v1544, %v1545
      %v1547 = vrot.slane %v1540, 3
      %v1548 = vsel %vm593, %v1545, %v1547
      %v1551 = vadd.f32 %v1534, %v1546
      %v1552 = vadd.f32 %v1535, %v1548
      %s1553 = sld [smem:[#allocation8 + $0x47]]
      %v1554 = vstv %s1553
      %v1555 = vmul.f32 %v1554, %v205
      %v1556 = vmul.f32 %v1554, %v201
      %v1557 = vmul.f32 %v1554, %v206
      %v1561 = vrot.slane %v1555, 3
      %v1562 = vrot.slane %v1556, 3
      %v1563 = vsel %vm593, %v1561, %v1562
      %v1564 = vrot.slane %v1557, 3
      %v1565 = vsel %vm593, %v1562, %v1564
      %1566 = vrot.lane.b32.xlu0 %v1563, 127
      %v1567 = vpop.permute.xlu0 %1566
      %1568 = vrot.lane.b32.xlu0 %v1565, 127
      %v1569 = vpop.permute.xlu0 %1568
      %v1572 = vadd.f32 %v1551, %v1567
      %v1573 = vadd.f32 %v1552, %v1569
      %s1574 = sld [smem:[#allocation8 + $0x48]]
      %v1575 = vstv %s1574
      %v1576 = vmul.f32 %v1575, %v205
      %v1577 = vmul.f32 %v1575, %v201
      %v1578 = vmul.f32 %v1575, %v206
      %v1582 = vrot.slane %v1576, 3
      %v1583 = vrot.slane %v1577, 3
      %v1584 = vsel %vm593, %v1582, %v1583
      %v1585 = vrot.slane %v1578, 3
      %v1586 = vsel %vm593, %v1583, %v1585
      %1587 = vrot.lane.b32.xlu0 %v1584, 126
      %v1588 = vpop.permute.xlu0 %1587
      %1589 = vrot.lane.b32.xlu0 %v1586, 126
      %v1590 = vpop.permute.xlu0 %1589
      %v1593 = vadd.f32 %v1572, %v1588
      %v1594 = vadd.f32 %v1573, %v1590
      %s1595 = sld [smem:[#allocation8 + $0x49]]
      %v1596 = vstv %s1595
      %v1597 = vmul.f32 %v1596, %v205
      %v1598 = vmul.f32 %v1596, %v201
      %v1599 = vmul.f32 %v1596, %v206
      %v1603 = vrot.slane %v1597, 3
      %v1604 = vrot.slane %v1598, 3
      %v1605 = vsel %vm593, %v1603, %v1604
      %v1606 = vrot.slane %v1599, 3
      %v1607 = vsel %vm593, %v1604, %v1606
      %1608 = vrot.lane.b32.xlu0 %v1605, 125
      %v1609 = vpop.permute.xlu0 %1608
      %1610 = vrot.lane.b32.xlu0 %v1607, 125
      %v1611 = vpop.permute.xlu0 %1610
      %v1614 = vadd.f32 %v1593, %v1609
      %v1615 = vadd.f32 %v1594, %v1611
      %s1616 = sld [smem:[#allocation8 + $0x4a]]
      %v1617 = vstv %s1616
      %v1618 = vmul.f32 %v1617, %v205
      %v1619 = vmul.f32 %v1617, %v201
      %v1620 = vmul.f32 %v1617, %v206
      %v1624 = vrot.slane %v1618, 3
      %v1625 = vrot.slane %v1619, 3
      %v1626 = vsel %vm593, %v1624, %v1625
      %v1627 = vrot.slane %v1620, 3
      %v1628 = vsel %vm593, %v1625, %v1627
      %1629 = vrot.lane.b32.xlu0 %v1626, 124
      %v1630 = vpop.permute.xlu0 %1629
      %1631 = vrot.lane.b32.xlu0 %v1628, 124
      %v1632 = vpop.permute.xlu0 %1631
      %v1635 = vadd.f32 %v1614, %v1630
      %v1636 = vadd.f32 %v1615, %v1632
      %s1637 = sld [smem:[#allocation8 + $0x4b]]
      %v1638 = vstv %s1637
      %v1639 = vmul.f32 %v1638, %v205
      %v1640 = vmul.f32 %v1638, %v201
      %v1641 = vmul.f32 %v1638, %v206
      %v1645 = vrot.slane %v1639, 3
      %v1646 = vrot.slane %v1640, 3
      %v1647 = vsel %vm593, %v1645, %v1646
      %v1648 = vrot.slane %v1641, 3
      %v1649 = vsel %vm593, %v1646, %v1648
      %1650 = vrot.lane.b32.xlu0 %v1647, 123
      %v1651 = vpop.permute.xlu0 %1650
      %1652 = vrot.lane.b32.xlu0 %v1649, 123
      %v1653 = vpop.permute.xlu0 %1652
      %v1656 = vadd.f32 %v1635, %v1651
      %v1657 = vadd.f32 %v1636, %v1653
      %s1658 = sld [smem:[#allocation8 + $0x4c]]
      %v1659 = vstv %s1658
      %v1660 = vmul.f32 %v1659, %v205
      %v1661 = vmul.f32 %v1659, %v201
      %v1662 = vmul.f32 %v1659, %v206
      %v1666 = vrot.slane %v1660, 3
      %v1667 = vrot.slane %v1661, 3
      %v1668 = vsel %vm593, %v1666, %v1667
      %v1669 = vrot.slane %v1662, 3
      %v1670 = vsel %vm593, %v1667, %v1669
      %1671 = vrot.lane.b32.xlu0 %v1668, 122
      %v1672 = vpop.permute.xlu0 %1671
      %1673 = vrot.lane.b32.xlu0 %v1670, 122
      %v1674 = vpop.permute.xlu0 %1673
      %v1677 = vadd.f32 %v1656, %v1672
      %v1678 = vadd.f32 %v1657, %v1674
      %s1679 = sld [smem:[#allocation8 + $0x4d]]
      %v1680 = vstv %s1679
      %v1681 = vmul.f32 %v1680, %v205
      %v1682 = vmul.f32 %v1680, %v201
      %v1683 = vmul.f32 %v1680, %v206
      %v1687 = vrot.slane %v1681, 4
      %v1688 = vrot.slane %v1682, 4
      %v1689 = vsel %vm737, %v1687, %v1688
      %v1690 = vrot.slane %v1683, 4
      %v1691 = vsel %vm737, %v1688, %v1690
      %v1694 = vadd.f32 %v1677, %v1689
      %v1695 = vadd.f32 %v1678, %v1691
      %s1696 = sld [smem:[#allocation8 + $0x4e]]
      %v1697 = vstv %s1696
      %v1698 = vmul.f32 %v1697, %v205
      %v1699 = vmul.f32 %v1697, %v201
      %v1700 = vmul.f32 %v1697, %v206
      %v1704 = vrot.slane %v1698, 4
      %v1705 = vrot.slane %v1699, 4
      %v1706 = vsel %vm737, %v1704, %v1705
      %v1707 = vrot.slane %v1700, 4
      %v1708 = vsel %vm737, %v1705, %v1707
      %1709 = vrot.lane.b32.xlu0 %v1706, 127
      %v1710 = vpop.permute.xlu0 %1709
      %1711 = vrot.lane.b32.xlu0 %v1708, 127
      %v1712 = vpop.permute.xlu0 %1711
      %v1715 = vadd.f32 %v1694, %v1710
      %v1716 = vadd.f32 %v1695, %v1712
      %s1717 = sld [smem:[#allocation8 + $0x4f]]
      %v1718 = vstv %s1717
      %v1719 = vmul.f32 %v1718, %v205
      %v1720 = vmul.f32 %v1718, %v201
      %v1721 = vmul.f32 %v1718, %v206
      %v1725 = vrot.slane %v1719, 4
      %v1726 = vrot.slane %v1720, 4
      %v1727 = vsel %vm737, %v1725, %v1726
      %v1728 = vrot.slane %v1721, 4
      %v1729 = vsel %vm737, %v1726, %v1728
      %1730 = vrot.lane.b32.xlu0 %v1727, 126
      %v1731 = vpop.permute.xlu0 %1730
      %1732 = vrot.lane.b32.xlu0 %v1729, 126
      %v1733 = vpop.permute.xlu0 %1732
      %v1736 = vadd.f32 %v1715, %v1731
      %v1737 = vadd.f32 %v1716, %v1733
      %s1738 = sld [smem:[#allocation8 + $0x50]]
      %v1739 = vstv %s1738
      %v1740 = vmul.f32 %v1739, %v205
      %v1741 = vmul.f32 %v1739, %v201
      %v1742 = vmul.f32 %v1739, %v206
      %v1746 = vrot.slane %v1740, 4
      %v1747 = vrot.slane %v1741, 4
      %v1748 = vsel %vm737, %v1746, %v1747
      %v1749 = vrot.slane %v1742, 4
      %v1750 = vsel %vm737, %v1747, %v1749
      %1751 = vrot.lane.b32.xlu0 %v1748, 125
      %v1752 = vpop.permute.xlu0 %1751
      %1753 = vrot.lane.b32.xlu0 %v1750, 125
      %v1754 = vpop.permute.xlu0 %1753
      %v1757 = vadd.f32 %v1736, %v1752
      %v1758 = vadd.f32 %v1737, %v1754
      %s1759 = sld [smem:[#allocation8 + $0x51]]
      %v1760 = vstv %s1759
      %v1761 = vmul.f32 %v1760, %v205
      %v1762 = vmul.f32 %v1760, %v201
      %v1763 = vmul.f32 %v1760, %v206
      %v1767 = vrot.slane %v1761, 4
      %v1768 = vrot.slane %v1762, 4
      %v1769 = vsel %vm737, %v1767, %v1768
      %v1770 = vrot.slane %v1763, 4
      %v1771 = vsel %vm737, %v1768, %v1770
      %1772 = vrot.lane.b32.xlu0 %v1769, 124
      %v1773 = vpop.permute.xlu0 %1772
      %1774 = vrot.lane.b32.xlu0 %v1771, 124
      %v1775 = vpop.permute.xlu0 %1774
      %v1778 = vadd.f32 %v1757, %v1773
      %v1779 = vadd.f32 %v1758, %v1775
      %s1780 = sld [smem:[#allocation8 + $0x52]]
      %v1781 = vstv %s1780
      %v1782 = vmul.f32 %v1781, %v205
      %v1783 = vmul.f32 %v1781, %v201
      %v1784 = vmul.f32 %v1781, %v206
      %v1788 = vrot.slane %v1782, 4
      %v1789 = vrot.slane %v1783, 4
      %v1790 = vsel %vm737, %v1788, %v1789
      %v1791 = vrot.slane %v1784, 4
      %v1792 = vsel %vm737, %v1789, %v1791
      %1793 = vrot.lane.b32.xlu0 %v1790, 123
      %v1794 = vpop.permute.xlu0 %1793
      %1795 = vrot.lane.b32.xlu0 %v1792, 123
      %v1796 = vpop.permute.xlu0 %1795
      %v1799 = vadd.f32 %v1778, %v1794
      %v1800 = vadd.f32 %v1779, %v1796
      %s1801 = sld [smem:[#allocation8 + $0x53]]
      %v1802 = vstv %s1801
      %v1803 = vmul.f32 %v1802, %v205
      %v1804 = vmul.f32 %v1802, %v201
      %v1805 = vmul.f32 %v1802, %v206
      %v1809 = vrot.slane %v1803, 4
      %v1810 = vrot.slane %v1804, 4
      %v1811 = vsel %vm737, %v1809, %v1810
      %v1812 = vrot.slane %v1805, 4
      %v1813 = vsel %vm737, %v1810, %v1812
      %1814 = vrot.lane.b32.xlu0 %v1811, 122
      %v1815 = vpop.permute.xlu0 %1814
      %1816 = vrot.lane.b32.xlu0 %v1813, 122
      %v1817 = vpop.permute.xlu0 %1816
      %v1820 = vadd.f32 %v1799, %v1815
      %v1821 = vadd.f32 %v1800, %v1817
      %s1822 = sld [smem:[#allocation8 + $0x54]]
      %v1823 = vstv %s1822
      %v1824 = vmul.f32 %v1823, %v205
      %v1825 = vmul.f32 %v1823, %v201
      %v1826 = vmul.f32 %v1823, %v206
      %v1830 = vrot.slane %v1824, 5
      %v1831 = vrot.slane %v1825, 5
      %v1832 = vsel %vm162, %v1830, %v1831
      %v1833 = vrot.slane %v1826, 5
      %v1834 = vsel %vm162, %v1831, %v1833
      %v1837 = vadd.f32 %v1820, %v1832
      %v1838 = vadd.f32 %v1821, %v1834
      %s1839 = sld [smem:[#allocation8 + $0x55]]
      %v1840 = vstv %s1839
      %v1841 = vmul.f32 %v1840, %v205
      %v1842 = vmul.f32 %v1840, %v201
      %v1843 = vmul.f32 %v1840, %v206
      %v1847 = vrot.slane %v1841, 5
      %v1848 = vrot.slane %v1842, 5
      %v1849 = vsel %vm162, %v1847, %v1848
      %v1850 = vrot.slane %v1843, 5
      %v1851 = vsel %vm162, %v1848, %v1850
      %1852 = vrot.lane.b32.xlu0 %v1849, 127
      %v1853 = vpop.permute.xlu0 %1852
      %1854 = vrot.lane.b32.xlu0 %v1851, 127
      %v1855 = vpop.permute.xlu0 %1854
      %v1858 = vadd.f32 %v1837, %v1853
      %v1859 = vadd.f32 %v1838, %v1855
      %s1860 = sld [smem:[#allocation8 + $0x56]]
      %v1861 = vstv %s1860
      %v1862 = vmul.f32 %v1861, %v205
      %v1863 = vmul.f32 %v1861, %v201
      %v1864 = vmul.f32 %v1861, %v206
      %v1868 = vrot.slane %v1862, 5
      %v1869 = vrot.slane %v1863, 5
      %v1870 = vsel %vm162, %v1868, %v1869
      %v1871 = vrot.slane %v1864, 5
      %v1872 = vsel %vm162, %v1869, %v1871
      %1873 = vrot.lane.b32.xlu0 %v1870, 126
      %v1874 = vpop.permute.xlu0 %1873
      %1875 = vrot.lane.b32.xlu0 %v1872, 126
      %v1876 = vpop.permute.xlu0 %1875
      %v1879 = vadd.f32 %v1858, %v1874
      %v1880 = vadd.f32 %v1859, %v1876
      %s1881 = sld [smem:[#allocation8 + $0x57]]
      %v1882 = vstv %s1881
      %v1883 = vmul.f32 %v1882, %v205
      %v1884 = vmul.f32 %v1882, %v201
      %v1885 = vmul.f32 %v1882, %v206
      %v1889 = vrot.slane %v1883, 5
      %v1890 = vrot.slane %v1884, 5
      %v1891 = vsel %vm162, %v1889, %v1890
      %v1892 = vrot.slane %v1885, 5
      %v1893 = vsel %vm162, %v1890, %v1892
      %1894 = vrot.lane.b32.xlu0 %v1891, 125
      %v1895 = vpop.permute.xlu0 %1894
      %1896 = vrot.lane.b32.xlu0 %v1893, 125
      %v1897 = vpop.permute.xlu0 %1896
      %v1900 = vadd.f32 %v1879, %v1895
      %v1901 = vadd.f32 %v1880, %v1897
      %s1902 = sld [smem:[#allocation8 + $0x58]]
      %v1903 = vstv %s1902
      %v1904 = vmul.f32 %v1903, %v205
      %v1905 = vmul.f32 %v1903, %v201
      %v1906 = vmul.f32 %v1903, %v206
      %v1910 = vrot.slane %v1904, 5
      %v1911 = vrot.slane %v1905, 5
      %v1912 = vsel %vm162, %v1910, %v1911
      %v1913 = vrot.slane %v1906, 5
      %v1914 = vsel %vm162, %v1911, %v1913
      %1915 = vrot.lane.b32.xlu0 %v1912, 124
      %v1916 = vpop.permute.xlu0 %1915
      %1917 = vrot.lane.b32.xlu0 %v1914, 124
      %v1918 = vpop.permute.xlu0 %1917
      %v1921 = vadd.f32 %v1900, %v1916
      %v1922 = vadd.f32 %v1901, %v1918
      %s1923 = sld [smem:[#allocation8 + $0x59]]
      %v1924 = vstv %s1923
      %v1925 = vmul.f32 %v1924, %v205
      %v1926 = vmul.f32 %v1924, %v201
      %v1927 = vmul.f32 %v1924, %v206
      %v1931 = vrot.slane %v1925, 5
      %v1932 = vrot.slane %v1926, 5
      %v1933 = vsel %vm162, %v1931, %v1932
      %v1934 = vrot.slane %v1927, 5
      %v1935 = vsel %vm162, %v1932, %v1934
      %1936 = vrot.lane.b32.xlu0 %v1933, 123
      %v1937 = vpop.permute.xlu0 %1936
      %1938 = vrot.lane.b32.xlu0 %v1935, 123
      %v1939 = vpop.permute.xlu0 %1938
      %v1942 = vadd.f32 %v1921, %v1937
      %v1943 = vadd.f32 %v1922, %v1939
      %s1944 = sld [smem:[#allocation8 + $0x5a]]
      %v1945 = vstv %s1944
      %v1946 = vmul.f32 %v1945, %v205
      %v1947 = vmul.f32 %v1945, %v201
      %v1948 = vmul.f32 %v1945, %v206
      %v1952 = vrot.slane %v1946, 5
      %v1953 = vrot.slane %v1947, 5
      %v1954 = vsel %vm162, %v1952, %v1953
      %v1955 = vrot.slane %v1948, 5
      %v1956 = vsel %vm162, %v1953, %v1955
      %1957 = vrot.lane.b32.xlu0 %v1954, 122
      %v1958 = vpop.permute.xlu0 %1957
      %1959 = vrot.lane.b32.xlu0 %v1956, 122
      %v1960 = vpop.permute.xlu0 %1959
      %v1963 = vadd.f32 %v1942, %v1958
      %v1964 = vadd.f32 %v1943, %v1960
      %s1965 = sld [smem:[#allocation8 + $0x5b]]
      %v1966 = vstv %s1965
      %v1967 = vmul.f32 %v1966, %v205
      %v1968 = vmul.f32 %v1966, %v201
      %v1969 = vmul.f32 %v1966, %v206
      %v1973 = vrot.slane %v1967, 6
      %v1974 = vrot.slane %v1968, 6
      %v1975 = vsel %vm1024, %v1973, %v1974
      %v1976 = vrot.slane %v1969, 6
      %v1977 = vsel %vm1024, %v1974, %v1976
      %v1980 = vadd.f32 %v1963, %v1975
      %v1981 = vadd.f32 %v1964, %v1977
      %s1982 = sld [smem:[#allocation8 + $0x5c]]
      %v1983 = vstv %s1982
      %v1984 = vmul.f32 %v1983, %v205
      %v1985 = vmul.f32 %v1983, %v201
      %v1986 = vmul.f32 %v1983, %v206
      %v1990 = vrot.slane %v1984, 6
      %v1991 = vrot.slane %v1985, 6
      %v1992 = vsel %vm1024, %v1990, %v1991
      %v1993 = vrot.slane %v1986, 6
      %v1994 = vsel %vm1024, %v1991, %v1993
      %1995 = vrot.lane.b32.xlu0 %v1992, 127
      %v1996 = vpop.permute.xlu0 %1995
      %1997 = vrot.lane.b32.xlu0 %v1994, 127
      %v1998 = vpop.permute.xlu0 %1997
      %v2001 = vadd.f32 %v1980, %v1996
      %v2002 = vadd.f32 %v1981, %v1998
      %s2003 = sld [smem:[#allocation8 + $0x5d]]
      %v2004 = vstv %s2003
      %v2005 = vmul.f32 %v2004, %v205
      %v2006 = vmul.f32 %v2004, %v201
      %v2007 = vmul.f32 %v2004, %v206
      %v2011 = vrot.slane %v2005, 6
      %v2012 = vrot.slane %v2006, 6
      %v2013 = vsel %vm1024, %v2011, %v2012
      %v2014 = vrot.slane %v2007, 6
      %v2015 = vsel %vm1024, %v2012, %v2014
      %2016 = vrot.lane.b32.xlu0 %v2013, 126
      %v2017 = vpop.permute.xlu0 %2016
      %2018 = vrot.lane.b32.xlu0 %v2015, 126
      %v2019 = vpop.permute.xlu0 %2018
      %v2022 = vadd.f32 %v2001, %v2017
      %v2023 = vadd.f32 %v2002, %v2019
      %s2024 = sld [smem:[#allocation8 + $0x5e]]
      %v2025 = vstv %s2024
      %v2026 = vmul.f32 %v2025, %v205
      %v2027 = vmul.f32 %v2025, %v201
      %v2028 = vmul.f32 %v2025, %v206
      %v2032 = vrot.slane %v2026, 6
      %v2033 = vrot.slane %v2027, 6
      %v2034 = vsel %vm1024, %v2032, %v2033
      %v2035 = vrot.slane %v2028, 6
      %v2036 = vsel %vm1024, %v2033, %v2035
      %2037 = vrot.lane.b32.xlu0 %v2034, 125
      %v2038 = vpop.permute.xlu0 %2037
      %2039 = vrot.lane.b32.xlu0 %v2036, 125
      %v2040 = vpop.permute.xlu0 %2039
      %v2043 = vadd.f32 %v2022, %v2038
      %v2044 = vadd.f32 %v2023, %v2040
      %s2045 = sld [smem:[#allocation8 + $0x5f]]
      %v2046 = vstv %s2045
      %v2047 = vmul.f32 %v2046, %v205
      %v2048 = vmul.f32 %v2046, %v201
      %v2049 = vmul.f32 %v2046, %v206
      %v2053 = vrot.slane %v2047, 6
      %v2054 = vrot.slane %v2048, 6
      %v2055 = vsel %vm1024, %v2053, %v2054
      %v2056 = vrot.slane %v2049, 6
      %v2057 = vsel %vm1024, %v2054, %v2056
      %2058 = vrot.lane.b32.xlu0 %v2055, 124
      %v2059 = vpop.permute.xlu0 %2058
      %2060 = vrot.lane.b32.xlu0 %v2057, 124
      %v2061 = vpop.permute.xlu0 %2060
      %v2064 = vadd.f32 %v2043, %v2059
      %v2065 = vadd.f32 %v2044, %v2061
      %s2066 = sld [smem:[#allocation8 + $0x60]]
      %v2067 = vstv %s2066
      %v2068 = vmul.f32 %v2067, %v205
      %v2069 = vmul.f32 %v2067, %v201
      %v2070 = vmul.f32 %v2067, %v206
      %v2074 = vrot.slane %v2068, 6
      %v2075 = vrot.slane %v2069, 6
      %v2076 = vsel %vm1024, %v2074, %v2075
      %v2077 = vrot.slane %v2070, 6
      %v2078 = vsel %vm1024, %v2075, %v2077
      %2079 = vrot.lane.b32.xlu0 %v2076, 123
      %v2080 = vpop.permute.xlu0 %2079
      %2081 = vrot.lane.b32.xlu0 %v2078, 123
      %v2082 = vpop.permute.xlu0 %2081
      %v2085 = vadd.f32 %v2064, %v2080
      %v2086 = vadd.f32 %v2065, %v2082
      %s2087 = sld [smem:[#allocation8 + $0x61]]
      %v2088 = vstv %s2087
      %v2089 = vmul.f32 %v2088, %v205
      %v2090 = vmul.f32 %v2088, %v201
      %v2091 = vmul.f32 %v2088, %v206
      %v2095 = vrot.slane %v2089, 6
      %v2096 = vrot.slane %v2090, 6
      %v2097 = vsel %vm1024, %v2095, %v2096
      %v2098 = vrot.slane %v2091, 6
      %v2099 = vsel %vm1024, %v2096, %v2098
      %2100 = vrot.lane.b32.xlu0 %v2097, 122
      %v2101 = vpop.permute.xlu0 %2100
      %2102 = vrot.lane.b32.xlu0 %v2099, 122
      %v2103 = vpop.permute.xlu0 %2102
      %v2106 = vadd.f32 %v2085, %v2101
      %v2107 = vadd.f32 %v2086, %v2103
      %v2108 = vxor.u32 %v2106, 2147483648
      %v2109 = vxor.u32 %v2107, 2147483648
      %v2110 = vmul.f32 %v2108, 1.442695
      %v2111 = vpow.pop %v2110
      %v2112 = vmul.f32 %v2109, 1.442695
      %v2113 = vpow.pop %v2112
      %v2114 = vadd.f32 %v2111, 1.0
      %v2115 = vadd.f32 %v2113, 1.0
      %v2116 = vrcp.pop %v2114
      %v2117 = vmul.f32 %v2114, %v2116
      %v2118 = vsub.f32 1.0, %v2117
      %v2119 = vmul.f32 %v2116, %v2118
      %v2120 = vadd.f32 %v2116, %v2119
      %vm2121 = vweird.f32 %v2114
      %vm2122 = vweird.f32 %v2116
      %vm2123 = vmor %vm2121, %vm2122
      %v2124 = vsel %vm2123, %v2116, %v2120
      %v2125 = vand.u32 2147483647, %v2114
      %vm2126 = vcmp.eq.f32.partialorder %v2125, 8.507059e+37
      %v2127 = vand.u32 %v2114, 2147483648
      %v2128 = vor.u32 1.1754944e-38, %v2127
      %v2129 = vsel %vm2126, %v2128, %v2124
      %v2130 = vmul.f32 1.0, %v2129
      %v2131 = vrcp.pop %v2115
      %v2132 = vmul.f32 %v2115, %v2131
      %v2133 = vsub.f32 1.0, %v2132
      %v2134 = vmul.f32 %v2131, %v2133
      %v2135 = vadd.f32 %v2131, %v2134
      %vm2136 = vweird.f32 %v2115
      %vm2137 = vweird.f32 %v2131
      %vm2138 = vmor %vm2136, %vm2137
      %v2139 = vsel %vm2138, %v2131, %v2135
      %v2140 = vand.u32 2147483647, %v2115
      %vm2141 = vcmp.eq.f32.partialorder %v2140, 8.507059e+37
      %v2142 = vand.u32 %v2115, 2147483648
      %v2143 = vor.u32 1.1754944e-38, %v2142
      %v2144 = vsel %vm2141, %v2143, %v2139
      %v2145 = vmul.f32 1.0, %v2144
      %2146 = vst.msk [vmem:[#allocation9] sm:$0xff] %vm113, %v2130
      %2147 = vst.msk [vmem:[#allocation9 + $0x8] sm:$0xff] %vm113, %v2145
      %2150 = vrot.lane.b32.xlu0 %v2130, 106
      %v2151 = vpop.permute.xlu0 %2150
      %2152 = vrot.lane.b32.xlu0 %v2145, 106
      %v2153 = vpop.permute.xlu0 %2152
      %s2156 = scalar_lea.vmem [#allocation9], 16
      %2157 = vst.msk [vmem:[%s2156] sm:$0xff] %vm113, %v2151
      %2158 = vst.msk [vmem:[%s2156 + $0x8] sm:$0xff] %vm113, %v2153
    $region25: #{tpu_custom_call.1} parent=1 // pred_fallthru
      _
    // Predicated region
    $region26: #{tpu_custom_call.1} parent=1 // pred_check
      _
    $region27: #{tpu_custom_call.1} parent=1 // pred_check_branch
      %2160 = sbr.rel (0) target = $region29
    $region28: #{tpu_custom_call.1} parent=1 // pred_region
      %2162 = vsyncadd [#allocation6], 0
      %s2163 = sshll.u32 [#allocation9], 4
      %s2164 = int_to_ptr.vmem [resolvable:$true] %s2163
      %s2165 = sshll.u32 %s2, 4
      %s2166 = int_to_ptr.hbm [resolvable:$true] %s2165
      %2171 = dma.vmem_to_hbm [thread:$0]  %s2164, 512, %s2166, [#allocation6], 128, 128, 8
    $region29: #{tpu_custom_call.1} parent=1 // pred_fallthru
      _
    // Predicated region
    $region30: #{tpu_custom_call.1} parent=1 // pred_check
      _
    $region31: #{tpu_custom_call.1} parent=1 // pred_check_branch
      %2173 = sbr.rel (0) target = $region33
    $region32: #{tpu_custom_call.1} parent=1 // pred_region
      %2175 = dma.done [#allocation6], 512
    $region33: #{tpu_custom_call.1} parent=1 // pred_fallthru
      _
    %2176 = vsyncpa [#allocation5], 1
    %2177 = vsyncpa [#allocation6], 1
    %2178 = vsyncpa [#allocation7], 1

</llo_original>
